<compile_context>
chip_gen: v7x
topology: tpu7x:2x2x1
jax: 0.10.0
libtpu: 0.0.40
codegen_flags: <defaults>
</compile_context>

<pallas_src>
import jax
import jax.numpy as jnp
from jax.experimental import pallas as pl
from jax.experimental.pallas import tpu as pltpu


# ---------------------------------------------------------------------------
# Small helpers: tile sizing / VMEM budgeting
# ---------------------------------------------------------------------------

def _round_up(x, m):
    return ((x + m - 1) // m) * m


def _vmem_budget_bytes():
    """Per-generation VMEM budget for the double-buffered working set."""
    try:
        cap = pltpu.get_tpu_info().vmem_capacity_bytes   # 128 MiB v5e/v6e, 64 MiB v7x
    except Exception:
        cap = 64 * 1024 * 1024
    return min(cap // 4, 32 * 1024 * 1024)


def _pick_tile(total, per_pixel_bytes, budget, max_tile=1024):
    """Largest lane tile (multiple of 128) whose double-buffered set fits budget."""
    t = budget // (2 * per_pixel_bytes)
    t = max(128, min(max_tile, t))
    t = (t // 128) * 128
    t = min(t, _round_up(total, 128))
    return int(t)


def _compiler_params(working_set_bytes):
    limit = int(min(60 * 2**20, max(32 * 2**20, 2 * working_set_bytes)))
    return pltpu.CompilerParams(
        dimension_semantics=("parallel", "parallel"),
        vmem_limit_bytes=limit)


# ---------------------------------------------------------------------------
# Pallas kernels
# ---------------------------------------------------------------------------

def _pw_bn_hswish_kernel(x_ref, w_ref, s_ref, b_ref, o_ref):
    """1x1 conv as (Cout, Cin) @ (Cin, T) matmul + folded BN + hardswish."""
    y = jnp.dot(w_ref[...], x_ref[0], preferred_element_type=jnp.float32)  # (Cout, T)
    y = y * s_ref[...] + b_ref[...]                       # folded BatchNorm
    y = y * jnp.clip((y + 3.0) * (1.0 / 6.0), 0.0, 1.0)   # hardswish
    o_ref[0] = y.astype(o_ref.dtype)


def _fused_down_kernel(patl_ref, patr_ref,
                       dwlw_ref, dwls_ref, dwlb_ref,
                       dwrw_ref, dwrs_ref, dwrb_ref,
                       wl_ref, wr_ref, s_ref, b_ref, o_ref):
    """Fused: 2x depthwise-3x3-s2 (+BN) -> 2x pointwise (+BN+hswish) -> concat+shuffle.

    patl_ref/patr_ref: (9, 1, C, T) im2col taps.  dw*w: (9, C, 1), dw*s/b: (C, 1).
    wl_ref/wr_ref: (Cout, C) pointwise weights whose rows are already placed at
    the channel_shuffle positions (zero rows where the other branch writes), so
    the kernel emits the final shuffled output tile (1, Cout, T) directly.
    """
    def depthwise(pat_ref, w9_ref, s_, b_):
        w9 = w9_ref[...].astype(jnp.float32)              # (9, C, 1)
        acc = pat_ref[0].astype(jnp.float32) * w9[0]      # (1, C, T)
        for k in range(1, 9):                             # unrolled (9 taps)
            acc = acc + pat_ref[k].astype(jnp.float32) * w9[k]
        return acc[0] * s_[...] + b_[...]                 # folded BN, no act -> (C, T)

    zl = depthwise(patl_ref, dwlw_ref, dwls_ref, dwlb_ref)    # (Cin, T), stays in VMEM
    zr = depthwise(patr_ref, dwrw_ref, dwrs_ref, dwrb_ref)    # (Cr,  T), stays in VMEM

    wl = wl_ref[...]
    wr = wr_ref[...]
    y = jnp.dot(wl, zl.astype(wl.dtype), preferred_element_type=jnp.float32)
    y = y + jnp.dot(wr, zr.astype(wr.dtype), preferred_element_type=jnp.float32)
    y = y * s_ref[...] + b_ref[...]                       # folded BN (shuffled order)
    y = y * jnp.clip((y + 3.0) * (1.0 / 6.0), 0.0, 1.0)   # hardswish
    o_ref[0] = y.astype(o_ref.dtype)


# ---------------------------------------------------------------------------
# Wrappers around pallas_call
# ---------------------------------------------------------------------------

def pointwise_conv_bn_hswish(x_nchw, w, scale, bias, max_tile=1024):
    """x: (N,Cin,H,W), w: (Cin,Cout), scale/bias: (Cout,) -> (N,Cout,H,W)."""
    N, Cin, H, W = x_nchw.shape
    Cout = w.shape[1]
    HW = H * W
    per_pixel = (Cin + Cout) * 4
    t = _pick_tile(HW, per_pixel, _vmem_budget_bytes(), max_tile)
    HWp = _round_up(HW, t)
    xf = x_nchw.reshape(N, Cin, HW)
    if HWp != HW:
        xf = jnp.pad(xf, ((0, 0), (0, 0), (0, HWp - HW)))

    out = pl.pallas_call(
        _pw_bn_hswish_kernel,
        out_shape=jax.ShapeDtypeStruct((N, Cout, HWp), x_nchw.dtype),
        grid=(N, HWp // t),
        in_specs=[
            pl.BlockSpec((1, Cin, t), lambda n, i: (n, 0, i)),
            pl.BlockSpec((Cout, Cin), lambda n, i: (0, 0)),
            pl.BlockSpec((Cout, 1), lambda n, i: (0, 0)),
            pl.BlockSpec((Cout, 1), lambda n, i: (0, 0)),
        ],
        out_specs=pl.BlockSpec((1, Cout, t), lambda n, i: (n, 0, i)),
        compiler_params=_compiler_params(2 * per_pixel * t),
    )(xf, jnp.transpose(w), scale.reshape(Cout, 1), bias.reshape(Cout, 1))
    return out[:, :, :HW].reshape(N, Cout, H, W)


def _dw_patches_nchw(x):
    """(N,C,H,W) -> (9, N, C, Ho*Wo) stride-2 pad-1 3x3 taps (channel-major)."""
    # TODO(synk): patch extraction is still materialized in HBM; fusing it into
    # the kernel via manual DMA of overlapping row strips would cut the
    # depthwise-stage HBM traffic further.
    N, C, H, W = x.shape
    Ho = (H - 1) // 2 + 1
    Wo = (W - 1) // 2 + 1
    xp = jnp.pad(x, ((0, 0), (0, 0), (1, 1), (1, 1)))
    taps = []
    for kh in range(3):
        for kw in range(3):
            tap = jax.lax.slice(
                xp, (0, 0, kh, kw),
                (N, C, kh + 2 * (Ho - 1) + 1, kw + 2 * (Wo - 1) + 1),
                (1, 1, 2, 2))
            taps.append(tap.reshape(N, C, Ho * Wo))
    return jnp.stack(taps, axis=0), Ho, Wo


def _fused_dw_pw_shuffle(pat_l, pat_r, dwl, dwr, wl_t, wr_t, s_cat, b_cat,
                         N, Ho, Wo, out_dtype, max_tile=1024):
    _, _, Cin, Mo = pat_l.shape
    Cr = pat_r.shape[2]
    Cout = wl_t.shape[0]
    per_pixel = (9 * Cin + 9 * Cr + Cout) * 4
    t = _pick_tile(Mo, per_pixel, _vmem_budget_bytes(), max_tile)
    Mop = _round_up(Mo, t)
    if Mop != Mo:
        padcfg = ((0, 0), (0, 0), (0, 0), (0, Mop - Mo))
        pat_l = jnp.pad(pat_l, padcfg)
        pat_r = jnp.pad(pat_r, padcfg)
    dwl_w, dwl_s, dwl_b = dwl
    dwr_w, dwr_s, dwr_b = dwr

    out = pl.pallas_call(
        _fused_down_kernel,
        out_shape=jax.ShapeDtypeStruct((N, Cout, Mop), out_dtype),
        grid=(N, Mop // t),
        in_specs=[
            pl.BlockSpec((9, 1, Cin, t), lambda n, i: (0, n, 0, i)),
            pl.BlockSpec((9, 1, Cr, t), lambda n, i: (0, n, 0, i)),
            pl.BlockSpec((9, Cin, 1), lambda n, i: (0, 0, 0)),
            pl.BlockSpec((Cin, 1), lambda n, i: (0, 0)),
            pl.BlockSpec((Cin, 1), lambda n, i: (0, 0)),
            pl.BlockSpec((9, Cr, 1), lambda n, i: (0, 0, 0)),
            pl.BlockSpec((Cr, 1), lambda n, i: (0, 0)),
            pl.BlockSpec((Cr, 1), lambda n, i: (0, 0)),
            pl.BlockSpec((Cout, Cin), lambda n, i: (0, 0)),
            pl.BlockSpec((Cout, Cr), lambda n, i: (0, 0)),
            pl.BlockSpec((Cout, 1), lambda n, i: (0, 0)),
            pl.BlockSpec((Cout, 1), lambda n, i: (0, 0)),
        ],
        out_specs=pl.BlockSpec((1, Cout, t), lambda n, i: (n, 0, i)),
        compiler_params=_compiler_params(2 * per_pixel * t),
    )(pat_l, pat_r, dwl_w, dwl_s, dwl_b, dwr_w, dwr_s, dwr_b,
      wl_t, wr_t, s_cat, b_cat)
    return out[:, :, :Mo].reshape(N, Cout, Ho, Wo)


def shufflev2_downsample(x_nchw, p, groups=2):
    """Forward pass of ShuffleV2DownSampling. Input/output NCHW."""
    N, in_ch, H, W = x_nchw.shape
    l_ch = p['pwl_w'].shape[1]
    r_ch = p['r1_w'].shape[1]
    or_ch = p['pwr_w'].shape[1]
    out_ch = l_ch + or_ch
    assert out_ch % groups == 0

    # right branch stage 1: 1x1 conv + BN + hswish at full resolution
    yr1 = pointwise_conv_bn_hswish(x_nchw, p['r1_w'], p['r1_s'], p['r1_b'])

    # im2col taps for both stride-2 depthwise convs (pure data layout glue)
    pat_l, Ho, Wo = _dw_patches_nchw(x_nchw)   # (9, N, in_ch, Ho*Wo)
    pat_r, _, _ = _dw_patches_nchw(yr1)        # (9, N, r_ch,  Ho*Wo)

    # fold concat + channel_shuffle permutation into the pointwise weights
    idx = jnp.arange(out_ch)
    perm = (idx % groups) * (out_ch // groups) + idx // groups
    wl_cat = jnp.concatenate(
        [p['pwl_w'], jnp.zeros((in_ch, or_ch), p['pwl_w'].dtype)], axis=1)
    wr_cat = jnp.concatenate(
        [jnp.zeros((r_ch, l_ch), p['pwr_w'].dtype), p['pwr_w']], axis=1)
    wl_t = jnp.take(wl_cat, perm, axis=1).T        # (out_ch, in_ch)
    wr_t = jnp.take(wr_cat, perm, axis=1).T        # (out_ch, r_ch)
    s_cat = jnp.concatenate([p['pwl_s'], p['pwr_s']])[perm].reshape(out_ch, 1)
    b_cat = jnp.concatenate([p['pwl_b'], p['pwr_b']])[perm].reshape(out_ch, 1)

    dwl = (p['dwl_w'].reshape(in_ch, 9).T[:, :, None],
           p['dwl_s'].reshape(in_ch, 1), p['dwl_b'].reshape(in_ch, 1))
    dwr = (p['dwr_w'].reshape(r_ch, 9).T[:, :, None],
           p['dwr_s'].reshape(r_ch, 1), p['dwr_b'].reshape(r_ch, 1))

    return _fused_dw_pw_shuffle(pat_l, pat_r, dwl, dwr, wl_t, wr_t, s_cat,
                                b_cat, N, Ho, Wo, x_nchw.dtype)


# ---------------------------------------------------------------------------
# Deterministic parameter init (eval-mode BN folded into scale/bias)
# ---------------------------------------------------------------------------

def _fold_bn(gamma, beta, mean, var, eps=1e-5):
    s = gamma / jnp.sqrt(var + eps)
    return s, beta - mean * s


def init_params(key, in_ch, out_ch, c_ratio=0.5):
    l_ch = int(in_ch * c_ratio)
    r_ch = in_ch - l_ch
    or_ch = out_ch - l_ch
    ks = list(jax.random.split(key, 10))

    def dw_w(k, c):
        return 0.2 * jax.random.normal(k, (c, 3, 3), jnp.float32)

    def pw_w(k, ci, co):
        return 0.2 * jax.random.normal(k, (ci, co), jnp.float32)

    def bn(k, c):
        k1, k2, k3, k4 = jax.random.split(k, 4)
        gamma = 1.0 + 0.1 * jax.random.normal(k1, (c,), jnp.float32)
        beta = 0.1 * jax.random.normal(k2, (c,), jnp.float32)
        mean = 0.1 * jax.random.normal(k3, (c,), jnp.float32)
        var = 1.0 + 0.1 * jnp.abs(jax.random.normal(k4, (c,), jnp.float32))
        return _fold_bn(gamma, beta, mean, var)

    p = {}
    p['dwl_w'] = dw_w(ks[0], in_ch)
    p['dwl_s'], p['dwl_b'] = bn(ks[1], in_ch)
    p['pwl_w'] = pw_w(ks[2], in_ch, l_ch)
    p['pwl_s'], p['pwl_b'] = bn(ks[3], l_ch)
    p['r1_w'] = pw_w(ks[4], in_ch, r_ch)
    p['r1_s'], p['r1_b'] = bn(ks[5], r_ch)
    p['dwr_w'] = dw_w(ks[6], r_ch)
    p['dwr_s'], p['dwr_b'] = bn(ks[7], r_ch)
    p['pwr_w'] = pw_w(ks[8], r_ch, or_ch)
    p['pwr_s'], p['pwr_b'] = bn(ks[9], or_ch)
    return p


# ---------------------------------------------------------------------------
# Pure-JAX reference (same math, via lax.conv) for correctness check
# ---------------------------------------------------------------------------

def ref_forward(x, p, groups=2):
    def hswish(y):
        return y * jnp.clip(y + 3.0, 0.0, 6.0) / 6.0

    def dw(y, w, s, b):
        C = y.shape[1]
        out = jax.lax.conv_general_dilated(
            y, w[:, None, :, :], (2, 2), [(1, 1), (1, 1)],
            dimension_numbers=('NCHW', 'OIHW', 'NCHW'),
            feature_group_count=C)
        return out * s.reshape(1, C, 1, 1) + b.reshape(1, C, 1, 1)

    def pw(y, w, s, b):
        D = w.shape[1]
        out = jnp.einsum('nchw,cd->ndhw', y, w)
        return hswish(out * s.reshape(1, D, 1, 1) + b.reshape(1, D, 1, 1))

    yl = pw(dw(x, p['dwl_w'], p['dwl_s'], p['dwl_b']),
            p['pwl_w'], p['pwl_s'], p['pwl_b'])
    yr = pw(x, p['r1_w'], p['r1_s'], p['r1_b'])
    yr = pw(dw(yr, p['dwr_w'], p['dwr_s'], p['dwr_b']),
            p['pwr_w'], p['pwr_s'], p['pwr_b'])
    y = jnp.concatenate([yl, yr], axis=1)
    N, C, Ho, Wo = y.shape
    y = y.reshape(N, groups, C // groups, Ho, Wo)
    y = jnp.swapaxes(y, 1, 2).reshape(N, C, Ho, Wo)
    return y


# ---------------------------------------------------------------------------

if __name__ == "__main__":
    key = jax.random.PRNGKey(0)
    kx, kp = jax.random.split(key)

    in_ch, out_ch = 4, 8
    x = jax.random.normal(kx, (2, in_ch, 16, 16), jnp.float32)  # NCHW like PyTorch
    params = init_params(kp, in_ch, out_ch)

    out = jax.jit(shufflev2_downsample)(x, params)
    out = jax.block_until_ready(out)

    ref = jax.block_until_ready(ref_forward(x, params))

    assert out.shape == (2, out_ch, 8, 8), out.shape
    assert jnp.allclose(out, ref, atol=1e-3, rtol=1e-3), \
        float(jnp.max(jnp.abs(out - ref)))
    print("KERNEL_OK")
</pallas_src>

<mosaic_0001>
module attributes {stable_mosaic.version = 11 : i64} {
  func.func @_pw_bn_hswish_kernel(%arg0: i32, %arg1: i32, %arg2: memref<1x4x256xf32, #tpu.memory_space<vmem>>, %arg3: memref<2x4xf32, #tpu.memory_space<vmem>>, %arg4: memref<2x1xf32, #tpu.memory_space<vmem>>, %arg5: memref<2x1xf32, #tpu.memory_space<vmem>>, %arg6: memref<1x2x256xf32, #tpu.memory_space<vmem>>) attributes {dimension_semantics = [#tpu.dimension_semantics<parallel>, #tpu.dimension_semantics<parallel>], iteration_bounds = array<i64: 2, 1>, scalar_prefetch = 0 : i64, scratch_operands = 0 : i64, tpu.core_type = #tpu.core_type<tc>, window_params = [{transform_indices = @transform_0, window_bounds = array<i64: 1, 4, 256>}, {pipeline_mode = #tpu.pipeline_mode<synchronous>, transform_indices = @transform_1, window_bounds = array<i64: 2, 4>}, {pipeline_mode = #tpu.pipeline_mode<synchronous>, transform_indices = @transform_2, window_bounds = array<i64: 2, 1>}, {pipeline_mode = #tpu.pipeline_mode<synchronous>, transform_indices = @transform_3, window_bounds = array<i64: 2, 1>}, {transform_indices = @transform_4, window_bounds = array<i64: 1, 2, 256>}]} {
    %c0 = arith.constant 0 : index
    %c0_0 = arith.constant 0 : index
    %0 = vector.load %arg3[%c0, %c0_0] : memref<2x4xf32, #tpu.memory_space<vmem>>, vector<2x4xf32>
    %c0_1 = arith.constant 0 : index
    %c0_2 = arith.constant 0 : index
    %c0_3 = arith.constant 0 : index
    %1 = vector.load %arg2[%c0_1, %c0_2, %c0_3] : memref<1x4x256xf32, #tpu.memory_space<vmem>>, vector<1x4x256xf32>
    %2 = vector.shape_cast %1 : vector<1x4x256xf32> to vector<4x256xf32>
    %cst = arith.constant dense<0.000000e+00> : vector<2x256xf32>
    %3 = tpu.matmul %0, %2, %cst {dimension_numbers = #tpu.dot_dimension_numbers<[1], [0], [0], [1], [0, 0, 1, 1], [], []>} : vector<2x4xf32>, vector<4x256xf32>, vector<2x256xf32> -> vector<2x256xf32>
    %c0_4 = arith.constant 0 : index
    %c0_5 = arith.constant 0 : index
    %4 = vector.load %arg4[%c0_4, %c0_5] : memref<2x1xf32, #tpu.memory_space<vmem>>, vector<2x1xf32>
    %5 = vector.broadcast %4 : vector<2x1xf32> to vector<2x256xf32>
    %6 = arith.mulf %3, %5 : vector<2x256xf32>
    %c0_6 = arith.constant 0 : index
    %c0_7 = arith.constant 0 : index
    %7 = vector.load %arg5[%c0_6, %c0_7] : memref<2x1xf32, #tpu.memory_space<vmem>>, vector<2x1xf32>
    %8 = vector.broadcast %7 : vector<2x1xf32> to vector<2x256xf32>
    %9 = arith.addf %6, %8 : vector<2x256xf32>
    %cst_8 = arith.constant 3.000000e+00 : f32
    %10 = vector.broadcast %cst_8 : f32 to vector<2x256xf32>
    %11 = arith.addf %9, %10 : vector<2x256xf32>
    %cst_9 = arith.constant 0.166666672 : f32
    %12 = vector.broadcast %cst_9 : f32 to vector<2x256xf32>
    %13 = arith.mulf %11, %12 : vector<2x256xf32>
    %cst_10 = arith.constant 0.000000e+00 : f32
    %cst_11 = arith.constant 1.000000e+00 : f32
    %14 = vector.broadcast %cst_10 : f32 to vector<2x256xf32>
    %15 = arith.maximumf %14, %13 : vector<2x256xf32>
    %16 = vector.broadcast %cst_11 : f32 to vector<2x256xf32>
    %17 = arith.minimumf %16, %15 : vector<2x256xf32>
    %18 = arith.mulf %9, %17 : vector<2x256xf32>
    %c0_12 = arith.constant 0 : index
    %c0_13 = arith.constant 0 : index
    %c0_14 = arith.constant 0 : index
    %19 = vector.load %arg6[%c0_12, %c0_13, %c0_14] : memref<1x2x256xf32, #tpu.memory_space<vmem>>, vector<1x2x256xf32>
    %20 = vector.shape_cast %19 : vector<1x2x256xf32> to vector<2x256xf32>
    %21 = vector.shape_cast %18 : vector<2x256xf32> to vector<1x2x256xf32>
    tpu.vector_store %arg6[%c0_12, %c0_13, %c0_14], %21 {strides = array<i32>} : memref<1x2x256xf32, #tpu.memory_space<vmem>>, vector<1x2x256xf32>,
    return
  }
  func.func @transform_0(%arg0: i32, %arg1: i32) -> (i32, i32, i32) {
    %c0_i32 = arith.constant 0 : i32
    %c0_i32_0 = arith.constant 0 : i32
    return %arg0, %c0_i32, %arg1 : i32, i32, i32
  }
  func.func @transform_1(%arg0: i32, %arg1: i32) -> (i32, i32) {
    %c0_i32 = arith.constant 0 : i32
    %c0_i32_0 = arith.constant 0 : i32
    %c0_i32_1 = arith.constant 0 : i32
    return %c0_i32, %c0_i32_0 : i32, i32
  }
  func.func @transform_2(%arg0: i32, %arg1: i32) -> (i32, i32) {
    %c0_i32 = arith.constant 0 : i32
    %c0_i32_0 = arith.constant 0 : i32
    %c0_i32_1 = arith.constant 0 : i32
    return %c0_i32, %c0_i32_0 : i32, i32
  }
  func.func @transform_3(%arg0: i32, %arg1: i32) -> (i32, i32) {
    %c0_i32 = arith.constant 0 : i32
    %c0_i32_0 = arith.constant 0 : i32
    %c0_i32_1 = arith.constant 0 : i32
    return %c0_i32, %c0_i32_0 : i32, i32
  }
  func.func @transform_4(%arg0: i32, %arg1: i32) -> (i32, i32, i32) {
    %c0_i32 = arith.constant 0 : i32
    %c0_i32_0 = arith.constant 0 : i32
    return %arg0, %c0_i32, %arg1 : i32, i32, i32
  }
}

module attributes {stable_mosaic.version = 11 : i64} {
  func.func @_fused_down_kernel(%arg0: i32, %arg1: i32, %arg2: memref<9x1x4x128xf32, #tpu.memory_space<vmem>>, %arg3: memref<9x1x2x128xf32, #tpu.memory_space<vmem>>, %arg4: memref<9x4x1xf32, #tpu.memory_space<vmem>>, %arg5: memref<4x1xf32, #tpu.memory_space<vmem>>, %arg6: memref<4x1xf32, #tpu.memory_space<vmem>>, %arg7: memref<9x2x1xf32, #tpu.memory_space<vmem>>, %arg8: memref<2x1xf32, #tpu.memory_space<vmem>>, %arg9: memref<2x1xf32, #tpu.memory_space<vmem>>, %arg10: memref<8x4xf32, #tpu.memory_space<vmem>>, %arg11: memref<8x2xf32, #tpu.memory_space<vmem>>, %arg12: memref<8x1xf32, #tpu.memory_space<vmem>>, %arg13: memref<8x1xf32, #tpu.memory_space<vmem>>, %arg14: memref<1x8x128xf32, #tpu.memory_space<vmem>>) attributes {dimension_semantics = [#tpu.dimension_semantics<parallel>, #tpu.dimension_semantics<parallel>], iteration_bounds = array<i64: 2, 1>, scalar_prefetch = 0 : i64, scratch_operands = 0 : i64, tpu.core_type = #tpu.core_type<tc>, window_params = [{transform_indices = @transform_0, window_bounds = array<i64: 9, 1, 4, 128>}, {transform_indices = @transform_1, window_bounds = array<i64: 9, 1, 2, 128>}, {pipeline_mode = #tpu.pipeline_mode<synchronous>, transform_indices = @transform_2, window_bounds = array<i64: 9, 4, 1>}, {pipeline_mode = #tpu.pipeline_mode<synchronous>, transform_indices = @transform_3, window_bounds = array<i64: 4, 1>}, {pipeline_mode = #tpu.pipeline_mode<synchronous>, transform_indices = @transform_4, window_bounds = array<i64: 4, 1>}, {pipeline_mode = #tpu.pipeline_mode<synchronous>, transform_indices = @transform_5, window_bounds = array<i64: 9, 2, 1>}, {pipeline_mode = #tpu.pipeline_mode<synchronous>, transform_indices = @transform_6, window_bounds = array<i64: 2, 1>}, {pipeline_mode = #tpu.pipeline_mode<synchronous>, transform_indices = @transform_7, window_bounds = array<i64: 2, 1>}, {pipeline_mode = #tpu.pipeline_mode<synchronous>, transform_indices = @transform_8, window_bounds = array<i64: 8, 4>}, {pipeline_mode = #tpu.pipeline_mode<synchronous>, transform_indices = @transform_9, window_bounds = array<i64: 8, 2>}, {pipeline_mode = #tpu.pipeline_mode<synchronous>, transform_indices = @transform_10, window_bounds = array<i64: 8, 1>}, {pipeline_mode = #tpu.pipeline_mode<synchronous>, transform_indices = @transform_11, window_bounds = array<i64: 8, 1>}, {transform_indices = @transform_12, window_bounds = array<i64: 1, 8, 128>}]} {
    %c0 = arith.constant 0 : index
    %c0_0 = arith.constant 0 : index
    %c0_1 = arith.constant 0 : index
    %0 = vector.load %arg4[%c0, %c0_0, %c0_1] : memref<9x4x1xf32, #tpu.memory_space<vmem>>, vector<9x4x1xf32>
    %c0_2 = arith.constant 0 : index
    %c0_3 = arith.constant 0 : index
    %c0_4 = arith.constant 0 : index
    %c0_5 = arith.constant 0 : index
    %1 = vector.load %arg2[%c0_2, %c0_3, %c0_4, %c0_5] : memref<9x1x4x128xf32, #tpu.memory_space<vmem>>, vector<1x1x4x128xf32>
    %2 = vector.shape_cast %1 : vector<1x1x4x128xf32> to vector<1x4x128xf32>
    %3 = vector.extract_strided_slice %0 {offsets = [0, 0, 0], sizes = [1, 4, 1], strides = [1, 1, 1]} : vector<9x4x1xf32> to vector<1x4x1xf32>
    %4 = vector.shape_cast %3 : vector<1x4x1xf32> to vector<4x1xf32>
    %5 = vector.shape_cast %4 : vector<4x1xf32> to vector<1x4x1xf32>
    %6 = vector.broadcast %5 : vector<1x4x1xf32> to vector<1x4x128xf32>
    %7 = arith.mulf %2, %6 : vector<1x4x128xf32>
    %c1 = arith.constant 1 : index
    %c0_6 = arith.constant 0 : index
    %c0_7 = arith.constant 0 : index
    %c0_8 = arith.constant 0 : index
    %8 = vector.load %arg2[%c1, %c0_6, %c0_7, %c0_8] : memref<9x1x4x128xf32, #tpu.memory_space<vmem>>, vector<1x1x4x128xf32>
    %9 = vector.shape_cast %8 : vector<1x1x4x128xf32> to vector<1x4x128xf32>
    %10 = vector.extract_strided_slice %0 {offsets = [1, 0, 0], sizes = [1, 4, 1], strides = [1, 1, 1]} : vector<9x4x1xf32> to vector<1x4x1xf32>
    %11 = vector.shape_cast %10 : vector<1x4x1xf32> to vector<4x1xf32>
    %12 = vector.shape_cast %11 : vector<4x1xf32> to vector<1x4x1xf32>
    %13 = vector.broadcast %12 : vector<1x4x1xf32> to vector<1x4x128xf32>
    %14 = arith.mulf %9, %13 : vector<1x4x128xf32>
    %15 = arith.addf %7, %14 : vector<1x4x128xf32>
    %c2 = arith.constant 2 : index
    %c0_9 = arith.constant 0 : index
    %c0_10 = arith.constant 0 : index
    %c0_11 = arith.constant 0 : index
    %16 = vector.load %arg2[%c2, %c0_9, %c0_10, %c0_11] : memref<9x1x4x128xf32, #tpu.memory_space<vmem>>, vector<1x1x4x128xf32>
    %17 = vector.shape_cast %16 : vector<1x1x4x128xf32> to vector<1x4x128xf32>
    %18 = vector.extract_strided_slice %0 {offsets = [2, 0, 0], sizes = [1, 4, 1], strides = [1, 1, 1]} : vector<9x4x1xf32> to vector<1x4x1xf32>
    %19 = vector.shape_cast %18 : vector<1x4x1xf32> to vector<4x1xf32>
    %20 = vector.shape_cast %19 : vector<4x1xf32> to vector<1x4x1xf32>
    %21 = vector.broadcast %20 : vector<1x4x1xf32> to vector<1x4x128xf32>
    %22 = arith.mulf %17, %21 : vector<1x4x128xf32>
    %23 = arith.addf %15, %22 : vector<1x4x128xf32>
    %c3 = arith.constant 3 : index
    %c0_12 = arith.constant 0 : index
    %c0_13 = arith.constant 0 : index
    %c0_14 = arith.constant 0 : index
    %24 = vector.load %arg2[%c3, %c0_12, %c0_13, %c0_14] : memref<9x1x4x128xf32, #tpu.memory_space<vmem>>, vector<1x1x4x128xf32>
    %25 = vector.shape_cast %24 : vector<1x1x4x128xf32> to vector<1x4x128xf32>
    %26 = vector.extract_strided_slice %0 {offsets = [3, 0, 0], sizes = [1, 4, 1], strides = [1, 1, 1]} : vector<9x4x1xf32> to vector<1x4x1xf32>
    %27 = vector.shape_cast %26 : vector<1x4x1xf32> to vector<4x1xf32>
    %28 = vector.shape_cast %27 : vector<4x1xf32> to vector<1x4x1xf32>
    %29 = vector.broadcast %28 : vector<1x4x1xf32> to vector<1x4x128xf32>
    %30 = arith.mulf %25, %29 : vector<1x4x128xf32>
    %31 = arith.addf %23, %30 : vector<1x4x128xf32>
    %c4 = arith.constant 4 : index
    %c0_15 = arith.constant 0 : index
    %c0_16 = arith.constant 0 : index
    %c0_17 = arith.constant 0 : index
    %32 = vector.load %arg2[%c4, %c0_15, %c0_16, %c0_17] : memref<9x1x4x128xf32, #tpu.memory_space<vmem>>, vector<1x1x4x128xf32>
    %33 = vector.shape_cast %32 : vector<1x1x4x128xf32> to vector<1x4x128xf32>
    %34 = vector.extract_strided_slice %0 {offsets = [4, 0, 0], sizes = [1, 4, 1], strides = [1, 1, 1]} : vector<9x4x1xf32> to vector<1x4x1xf32>
    %35 = vector.shape_cast %34 : vector<1x4x1xf32> to vector<4x1xf32>
    %36 = vector.shape_cast %35 : vector<4x1xf32> to vector<1x4x1xf32>
    %37 = vector.broadcast %36 : vector<1x4x1xf32> to vector<1x4x128xf32>
    %38 = arith.mulf %33, %37 : vector<1x4x128xf32>
    %39 = arith.addf %31, %38 : vector<1x4x128xf32>
    %c5 = arith.constant 5 : index
    %c0_18 = arith.constant 0 : index
    %c0_19 = arith.constant 0 : index
    %c0_20 = arith.constant 0 : index
    %40 = vector.load %arg2[%c5, %c0_18, %c0_19, %c0_20] : memref<9x1x4x128xf32, #tpu.memory_space<vmem>>, vector<1x1x4x128xf32>
    %41 = vector.shape_cast %40 : vector<1x1x4x128xf32> to vector<1x4x128xf32>
    %42 = vector.extract_strided_slice %0 {offsets = [5, 0, 0], sizes = [1, 4, 1], strides = [1, 1, 1]} : vector<9x4x1xf32> to vector<1x4x1xf32>
    %43 = vector.shape_cast %42 : vector<1x4x1xf32> to vector<4x1xf32>
    %44 = vector.shape_cast %43 : vector<4x1xf32> to vector<1x4x1xf32>
    %45 = vector.broadcast %44 : vector<1x4x1xf32> to vector<1x4x128xf32>
    %46 = arith.mulf %41, %45 : vector<1x4x128xf32>
    %47 = arith.addf %39, %46 : vector<1x4x128xf32>
    %c6 = arith.constant 6 : index
    %c0_21 = arith.constant 0 : index
    %c0_22 = arith.constant 0 : index
    %c0_23 = arith.constant 0 : index
    %48 = vector.load %arg2[%c6, %c0_21, %c0_22, %c0_23] : memref<9x1x4x128xf32, #tpu.memory_space<vmem>>, vector<1x1x4x128xf32>
    %49 = vector.shape_cast %48 : vector<1x1x4x128xf32> to vector<1x4x128xf32>
    %50 = vector.extract_strided_slice %0 {offsets = [6, 0, 0], sizes = [1, 4, 1], strides = [1, 1, 1]} : vector<9x4x1xf32> to vector<1x4x1xf32>
    %51 = vector.shape_cast %50 : vector<1x4x1xf32> to vector<4x1xf32>
    %52 = vector.shape_cast %51 : vector<4x1xf32> to vector<1x4x1xf32>
    %53 = vector.broadcast %52 : vector<1x4x1xf32> to vector<1x4x128xf32>
    %54 = arith.mulf %49, %53 : vector<1x4x128xf32>
    %55 = arith.addf %47, %54 : vector<1x4x128xf32>
    %c7 = arith.constant 7 : index
    %c0_24 = arith.constant 0 : index
    %c0_25 = arith.constant 0 : index
    %c0_26 = arith.constant 0 : index
    %56 = vector.load %arg2[%c7, %c0_24, %c0_25, %c0_26] : memref<9x1x4x128xf32, #tpu.memory_space<vmem>>, vector<1x1x4x128xf32>
    %57 = vector.shape_cast %56 : vector<1x1x4x128xf32> to vector<1x4x128xf32>
    %58 = vector.extract_strided_slice %0 {offsets = [7, 0, 0], sizes = [1, 4, 1], strides = [1, 1, 1]} : vector<9x4x1xf32> to vector<1x4x1xf32>
    %59 = vector.shape_cast %58 : vector<1x4x1xf32> to vector<4x1xf32>
    %60 = vector.shape_cast %59 : vector<4x1xf32> to vector<1x4x1xf32>
    %61 = vector.broadcast %60 : vector<1x4x1xf32> to vector<1x4x128xf32>
    %62 = arith.mulf %57, %61 : vector<1x4x128xf32>
    %63 = arith.addf %55, %62 : vector<1x4x128xf32>
    %c8 = arith.constant 8 : index
    %c0_27 = arith.constant 0 : index
    %c0_28 = arith.constant 0 : index
    %c0_29 = arith.constant 0 : index
    %64 = vector.load %arg2[%c8, %c0_27, %c0_28, %c0_29] : memref<9x1x4x128xf32, #tpu.memory_space<vmem>>, vector<1x1x4x128xf32>
    %65 = vector.shape_cast %64 : vector<1x1x4x128xf32> to vector<1x4x128xf32>
    %66 = vector.extract_strided_slice %0 {offsets = [8, 0, 0], sizes = [1, 4, 1], strides = [1, 1, 1]} : vector<9x4x1xf32> to vector<1x4x1xf32>
    %67 = vector.shape_cast %66 : vector<1x4x1xf32> to vector<4x1xf32>
    %68 = vector.shape_cast %67 : vector<4x1xf32> to vector<1x4x1xf32>
    %69 = vector.broadcast %68 : vector<1x4x1xf32> to vector<1x4x128xf32>
    %70 = arith.mulf %65, %69 : vector<1x4x128xf32>
    %71 = arith.addf %63, %70 : vector<1x4x128xf32>
    %72 = vector.shape_cast %71 : vector<1x4x128xf32> to vector<4x128xf32>
    %c0_30 = arith.constant 0 : index
    %c0_31 = arith.constant 0 : index
    %73 = vector.load %arg5[%c0_30, %c0_31] : memref<4x1xf32, #tpu.memory_space<vmem>>, vector<4x1xf32>
    %74 = vector.broadcast %73 : vector<4x1xf32> to vector<4x128xf32>
    %75 = arith.mulf %72, %74 : vector<4x128xf32>
    %c0_32 = arith.constant 0 : index
    %c0_33 = arith.constant 0 : index
    %76 = vector.load %arg6[%c0_32, %c0_33] : memref<4x1xf32, #tpu.memory_space<vmem>>, vector<4x1xf32>
    %77 = vector.broadcast %76 : vector<4x1xf32> to vector<4x128xf32>
    %78 = arith.addf %75, %77 : vector<4x128xf32>
    %c0_34 = arith.constant 0 : index
    %c0_35 = arith.constant 0 : index
    %c0_36 = arith.constant 0 : index
    %79 = vector.load %arg7[%c0_34, %c0_35, %c0_36] : memref<9x2x1xf32, #tpu.memory_space<vmem>>, vector<9x2x1xf32>
    %c0_37 = arith.constant 0 : index
    %c0_38 = arith.constant 0 : index
    %c0_39 = arith.constant 0 : index
    %c0_40 = arith.constant 0 : index
    %80 = vector.load %arg3[%c0_37, %c0_38, %c0_39, %c0_40] : memref<9x1x2x128xf32, #tpu.memory_space<vmem>>, vector<1x1x2x128xf32>
    %81 = vector.shape_cast %80 : vector<1x1x2x128xf32> to vector<1x2x128xf32>
    %82 = vector.extract_strided_slice %79 {offsets = [0, 0, 0], sizes = [1, 2, 1], strides = [1, 1, 1]} : vector<9x2x1xf32> to vector<1x2x1xf32>
    %83 = vector.shape_cast %82 : vector<1x2x1xf32> to vector<2x1xf32>
    %84 = vector.shape_cast %83 : vector<2x1xf32> to vector<1x2x1xf32>
    %85 = vector.broadcast %84 : vector<1x2x1xf32> to vector<1x2x128xf32>
    %86 = arith.mulf %81, %85 : vector<1x2x128xf32>
    %c1_41 = arith.constant 1 : index
    %c0_42 = arith.constant 0 : index
    %c0_43 = arith.constant 0 : index
    %c0_44 = arith.constant 0 : index
    %87 = vector.load %arg3[%c1_41, %c0_42, %c0_43, %c0_44] : memref<9x1x2x128xf32, #tpu.memory_space<vmem>>, vector<1x1x2x128xf32>
    %88 = vector.shape_cast %87 : vector<1x1x2x128xf32> to vector<1x2x128xf32>
    %89 = vector.extract_strided_slice %79 {offsets = [1, 0, 0], sizes = [1, 2, 1], strides = [1, 1, 1]} : vector<9x2x1xf32> to vector<1x2x1xf32>
    %90 = vector.shape_cast %89 : vector<1x2x1xf32> to vector<2x1xf32>
    %91 = vector.shape_cast %90 : vector<2x1xf32> to vector<1x2x1xf32>
    %92 = vector.broadcast %91 : vector<1x2x1xf32> to vector<1x2x128xf32>
    %93 = arith.mulf %88, %92 : vector<1x2x128xf32>
    %94 = arith.addf %86, %93 : vector<1x2x128xf32>
    %c2_45 = arith.constant 2 : index
    %c0_46 = arith.constant 0 : index
    %c0_47 = arith.constant 0 : index
    %c0_48 = arith.constant 0 : index
    %95 = vector.load %arg3[%c2_45, %c0_46, %c0_47, %c0_48] : memref<9x1x2x128xf32, #tpu.memory_space<vmem>>, vector<1x1x2x128xf32>
    %96 = vector.shape_cast %95 : vector<1x1x2x128xf32> to vector<1x2x128xf32>
    %97 = vector.extract_strided_slice %79 {offsets = [2, 0, 0], sizes = [1, 2, 1], strides = [1, 1, 1]} : vector<9x2x1xf32> to vector<1x2x1xf32>
    %98 = vector.shape_cast %97 : vector<1x2x1xf32> to vector<2x1xf32>
    %99 = vector.shape_cast %98 : vector<2x1xf32> to vector<1x2x1xf32>
    %100 = vector.broadcast %99 : vector<1x2x1xf32> to vector<1x2x128xf32>
    %101 = arith.mulf %96, %100 : vector<1x2x128xf32>
    %102 = arith.addf %94, %101 : vector<1x2x128xf32>
    %c3_49 = arith.constant 3 : index
    %c0_50 = arith.constant 0 : index
    %c0_51 = arith.constant 0 : index
    %c0_52 = arith.constant 0 : index
    %103 = vector.load %arg3[%c3_49, %c0_50, %c0_51, %c0_52] : memref<9x1x2x128xf32, #tpu.memory_space<vmem>>, vector<1x1x2x128xf32>
    %104 = vector.shape_cast %103 : vector<1x1x2x128xf32> to vector<1x2x128xf32>
    %105 = vector.extract_strided_slice %79 {offsets = [3, 0, 0], sizes = [1, 2, 1], strides = [1, 1, 1]} : vector<9x2x1xf32> to vector<1x2x1xf32>
    %106 = vector.shape_cast %105 : vector<1x2x1xf32> to vector<2x1xf32>
    %107 = vector.shape_cast %106 : vector<2x1xf32> to vector<1x2x1xf32>
    %108 = vector.broadcast %107 : vector<1x2x1xf32> to vector<1x2x128xf32>
    %109 = arith.mulf %104, %108 : vector<1x2x128xf32>
    %110 = arith.addf %102, %109 : vector<1x2x128xf32>
    %c4_53 = arith.constant 4 : index
    %c0_54 = arith.constant 0 : index
    %c0_55 = arith.constant 0 : index
    %c0_56 = arith.constant 0 : index
    %111 = vector.load %arg3[%c4_53, %c0_54, %c0_55, %c0_56] : memref<9x1x2x128xf32, #tpu.memory_space<vmem>>, vector<1x1x2x128xf32>
    %112 = vector.shape_cast %111 : vector<1x1x2x128xf32> to vector<1x2x128xf32>
    %113 = vector.extract_strided_slice %79 {offsets = [4, 0, 0], sizes = [1, 2, 1], strides = [1, 1, 1]} : vector<9x2x1xf32> to vector<1x2x1xf32>
    %114 = vector.shape_cast %113 : vector<1x2x1xf32> to vector<2x1xf32>
    %115 = vector.shape_cast %114 : vector<2x1xf32> to vector<1x2x1xf32>
    %116 = vector.broadcast %115 : vector<1x2x1xf32> to vector<1x2x128xf32>
    %117 = arith.mulf %112, %116 : vector<1x2x128xf32>
    %118 = arith.addf %110, %117 : vector<1x2x128xf32>
    %c5_57 = arith.constant 5 : index
    %c0_58 = arith.constant 0 : index
    %c0_59 = arith.constant 0 : index
    %c0_60 = arith.constant 0 : index
    %119 = vector.load %arg3[%c5_57, %c0_58, %c0_59, %c0_60] : memref<9x1x2x128xf32, #tpu.memory_space<vmem>>, vector<1x1x2x128xf32>
    %120 = vector.shape_cast %119 : vector<1x1x2x128xf32> to vector<1x2x128xf32>
    %121 = vector.extract_strided_slice %79 {offsets = [5, 0, 0], sizes = [1, 2, 1], strides = [1, 1, 1]} : vector<9x2x1xf32> to vector<1x2x1xf32>
    %122 = vector.shape_cast %121 : vector<1x2x1xf32> to vector<2x1xf32>
    %123 = vector.shape_cast %122 : vector<2x1xf32> to vector<1x2x1xf32>
    %124 = vector.broadcast %123 : vector<1x2x1xf32> to vector<1x2x128xf32>
    %125 = arith.mulf %120, %124 : vector<1x2x128xf32>
    %126 = arith.addf %118, %125 : vector<1x2x128xf32>
    %c6_61 = arith.constant 6 : index
    %c0_62 = arith.constant 0 : index
    %c0_63 = arith.constant 0 : index
    %c0_64 = arith.constant 0 : index
    %127 = vector.load %arg3[%c6_61, %c0_62, %c0_63, %c0_64] : memref<9x1x2x128xf32, #tpu.memory_space<vmem>>, vector<1x1x2x128xf32>
    %128 = vector.shape_cast %127 : vector<1x1x2x128xf32> to vector<1x2x128xf32>
    %129 = vector.extract_strided_slice %79 {offsets = [6, 0, 0], sizes = [1, 2, 1], strides = [1, 1, 1]} : vector<9x2x1xf32> to vector<1x2x1xf32>
    %130 = vector.shape_cast %129 : vector<1x2x1xf32> to vector<2x1xf32>
    %131 = vector.shape_cast %130 : vector<2x1xf32> to vector<1x2x1xf32>
    %132 = vector.broadcast %131 : vector<1x2x1xf32> to vector<1x2x128xf32>
    %133 = arith.mulf %128, %132 : vector<1x2x128xf32>
    %134 = arith.addf %126, %133 : vector<1x2x128xf32>
    %c7_65 = arith.constant 7 : index
    %c0_66 = arith.constant 0 : index
    %c0_67 = arith.constant 0 : index
    %c0_68 = arith.constant 0 : index
    %135 = vector.load %arg3[%c7_65, %c0_66, %c0_67, %c0_68] : memref<9x1x2x128xf32, #tpu.memory_space<vmem>>, vector<1x1x2x128xf32>
    %136 = vector.shape_cast %135 : vector<1x1x2x128xf32> to vector<1x2x128xf32>
    %137 = vector.extract_strided_slice %79 {offsets = [7, 0, 0], sizes = [1, 2, 1], strides = [1, 1, 1]} : vector<9x2x1xf32> to vector<1x2x1xf32>
    %138 = vector.shape_cast %137 : vector<1x2x1xf32> to vector<2x1xf32>
    %139 = vector.shape_cast %138 : vector<2x1xf32> to vector<1x2x1xf32>
    %140 = vector.broadcast %139 : vector<1x2x1xf32> to vector<1x2x128xf32>
    %141 = arith.mulf %136, %140 : vector<1x2x128xf32>
    %142 = arith.addf %134, %141 : vector<1x2x128xf32>
    %c8_69 = arith.constant 8 : index
    %c0_70 = arith.constant 0 : index
    %c0_71 = arith.constant 0 : index
    %c0_72 = arith.constant 0 : index
    %143 = vector.load %arg3[%c8_69, %c0_70, %c0_71, %c0_72] : memref<9x1x2x128xf32, #tpu.memory_space<vmem>>, vector<1x1x2x128xf32>
    %144 = vector.shape_cast %143 : vector<1x1x2x128xf32> to vector<1x2x128xf32>
    %145 = vector.extract_strided_slice %79 {offsets = [8, 0, 0], sizes = [1, 2, 1], strides = [1, 1, 1]} : vector<9x2x1xf32> to vector<1x2x1xf32>
    %146 = vector.shape_cast %145 : vector<1x2x1xf32> to vector<2x1xf32>
    %147 = vector.shape_cast %146 : vector<2x1xf32> to vector<1x2x1xf32>
    %148 = vector.broadcast %147 : vector<1x2x1xf32> to vector<1x2x128xf32>
    %149 = arith.mulf %144, %148 : vector<1x2x128xf32>
    %150 = arith.addf %142, %149 : vector<1x2x128xf32>
    %151 = vector.shape_cast %150 : vector<1x2x128xf32> to vector<2x128xf32>
    %c0_73 = arith.constant 0 : index
    %c0_74 = arith.constant 0 : index
    %152 = vector.load %arg8[%c0_73, %c0_74] : memref<2x1xf32, #tpu.memory_space<vmem>>, vector<2x1xf32>
    %153 = vector.broadcast %152 : vector<2x1xf32> to vector<2x128xf32>
    %154 = arith.mulf %151, %153 : vector<2x128xf32>
    %c0_75 = arith.constant 0 : index
    %c0_76 = arith.constant 0 : index
    %155 = vector.load %arg9[%c0_75, %c0_76] : memref<2x1xf32, #tpu.memory_space<vmem>>, vector<2x1xf32>
    %156 = vector.broadcast %155 : vector<2x1xf32> to vector<2x128xf32>
    %157 = arith.addf %154, %156 : vector<2x128xf32>
    %c0_77 = arith.constant 0 : index
    %c0_78 = arith.constant 0 : index
    %158 = vector.load %arg10[%c0_77, %c0_78] : memref<8x4xf32, #tpu.memory_space<vmem>>, vector<8x4xf32>
    %c0_79 = arith.constant 0 : index
    %c0_80 = arith.constant 0 : index
    %159 = vector.load %arg11[%c0_79, %c0_80] : memref<8x2xf32, #tpu.memory_space<vmem>>, vector<8x2xf32>
    %cst = arith.constant dense<0.000000e+00> : vector<8x128xf32>
    %160 = tpu.matmul %158, %78, %cst {dimension_numbers = #tpu.dot_dimension_numbers<[1], [0], [0], [1], [0, 0, 1, 1], [], []>} : vector<8x4xf32>, vector<4x128xf32>, vector<8x128xf32> -> vector<8x128xf32>
    %cst_81 = arith.constant dense<0.000000e+00> : vector<8x128xf32>
    %161 = tpu.matmul %159, %157, %cst_81 {dimension_numbers = #tpu.dot_dimension_numbers<[1], [0], [0], [1], [0, 0, 1, 1], [], []>} : vector<8x2xf32>, vector<2x128xf32>, vector<8x128xf32> -> vector<8x128xf32>
    %162 = arith.addf %160, %161 : vector<8x128xf32>
    %c0_82 = arith.constant 0 : index
    %c0_83 = arith.constant 0 : index
    %163 = vector.load %arg12[%c0_82, %c0_83] : memref<8x1xf32, #tpu.memory_space<vmem>>, vector<8x1xf32>
    %164 = vector.broadcast %163 : vector<8x1xf32> to vector<8x128xf32>
    %165 = arith.mulf %162, %164 : vector<8x128xf32>
    %c0_84 = arith.constant 0 : index
    %c0_85 = arith.constant 0 : index
    %166 = vector.load %arg13[%c0_84, %c0_85] : memref<8x1xf32, #tpu.memory_space<vmem>>, vector<8x1xf32>
    %167 = vector.broadcast %166 : vector<8x1xf32> to vector<8x128xf32>
    %168 = arith.addf %165, %167 : vector<8x128xf32>
    %cst_86 = arith.constant 3.000000e+00 : f32
    %169 = vector.broadcast %cst_86 : f32 to vector<8x128xf32>
    %170 = arith.addf %168, %169 : vector<8x128xf32>
    %cst_87 = arith.constant 0.166666672 : f32
    %171 = vector.broadcast %cst_87 : f32 to vector<8x128xf32>
    %172 = arith.mulf %170, %171 : vector<8x128xf32>
    %cst_88 = arith.constant 0.000000e+00 : f32
    %cst_89 = arith.constant 1.000000e+00 : f32
    %173 = vector.broadcast %cst_88 : f32 to vector<8x128xf32>
    %174 = arith.maximumf %173, %172 : vector<8x128xf32>
    %175 = vector.broadcast %cst_89 : f32 to vector<8x128xf32>
    %176 = arith.minimumf %175, %174 : vector<8x128xf32>
    %177 = arith.mulf %168, %176 : vector<8x128xf32>
    %c0_90 = arith.constant 0 : index
    %c0_91 = arith.constant 0 : index
    %c0_92 = arith.constant 0 : index
    %178 = vector.load %arg14[%c0_90, %c0_91, %c0_92] : memref<1x8x128xf32, #tpu.memory_space<vmem>>, vector<1x8x128xf32>
    %179 = vector.shape_cast %178 : vector<1x8x128xf32> to vector<8x128xf32>
    %180 = vector.shape_cast %177 : vector<8x128xf32> to vector<1x8x128xf32>
    tpu.vector_store %arg14[%c0_90, %c0_91, %c0_92], %180 {strides = array<i32>} : memref<1x8x128xf32, #tpu.memory_space<vmem>>, vector<1x8x128xf32>,
    return
  }
  func.func @transform_0(%arg0: i32, %arg1: i32) -> (i32, i32, i32, i32) {
    %c0_i32 = arith.constant 0 : i32
    %c0_i32_0 = arith.constant 0 : i32
    %c0_i32_1 = arith.constant 0 : i32
    return %c0_i32, %arg0, %c0_i32_0, %arg1 : i32, i32, i32, i32
  }
  func.func @transform_1(%arg0: i32, %arg1: i32) -> (i32, i32, i32, i32) {
    %c0_i32 = arith.constant 0 : i32
    %c0_i32_0 = arith.constant 0 : i32
    %c0_i32_1 = arith.constant 0 : i32
    return %c0_i32, %arg0, %c0_i32_0, %arg1 : i32, i32, i32, i32
  }
  func.func @transform_2(%arg0: i32, %arg1: i32) -> (i32, i32, i32) {
    %c0_i32 = arith.constant 0 : i32
    %c0_i32_0 = arith.constant 0 : i32
    %c0_i32_1 = arith.constant 0 : i32
    %c0_i32_2 = arith.constant 0 : i32
    return %c0_i32, %c0_i32_0, %c0_i32_1 : i32, i32, i32
  }
  func.func @transform_3(%arg0: i32, %arg1: i32) -> (i32, i32) {
    %c0_i32 = arith.constant 0 : i32
    %c0_i32_0 = arith.constant 0 : i32
    %c0_i32_1 = arith.constant 0 : i32
    return %c0_i32, %c0_i32_0 : i32, i32
  }
  func.func @transform_4(%arg0: i32, %arg1: i32) -> (i32, i32) {
    %c0_i32 = arith.constant 0 : i32
    %c0_i32_0 = arith.constant 0 : i32
    %c0_i32_1 = arith.constant 0 : i32
    return %c0_i32, %c0_i32_0 : i32, i32
  }
  func.func @transform_5(%arg0: i32, %arg1: i32) -> (i32, i32, i32) {
    %c0_i32 = arith.constant 0 : i32
    %c0_i32_0 = arith.constant 0 : i32
    %c0_i32_1 = arith.constant 0 : i32
    %c0_i32_2 = arith.constant 0 : i32
    return %c0_i32, %c0_i32_0, %c0_i32_1 : i32, i32, i32
  }
  func.func @transform_6(%arg0: i32, %arg1: i32) -> (i32, i32) {
    %c0_i32 = arith.constant 0 : i32
    %c0_i32_0 = arith.constant 0 : i32
    %c0_i32_1 = arith.constant 0 : i32
    return %c0_i32, %c0_i32_0 : i32, i32
  }
  func.func @transform_7(%arg0: i32, %arg1: i32) -> (i32, i32) {
    %c0_i32 = arith.constant 0 : i32
    %c0_i32_0 = arith.constant 0 : i32
    %c0_i32_1 = arith.constant 0 : i32
    return %c0_i32, %c0_i32_0 : i32, i32
  }
  func.func @transform_8(%arg0: i32, %arg1: i32) -> (i32, i32) {
    %c0_i32 = arith.constant 0 : i32
    %c0_i32_0 = arith.constant 0 : i32
    %c0_i32_1 = arith.constant 0 : i32
    return %c0_i32, %c0_i32_0 : i32, i32
  }
  func.func @transform_9(%arg0: i32, %arg1: i32) -> (i32, i32) {
    %c0_i32 = arith.constant 0 : i32
    %c0_i32_0 = arith.constant 0 : i32
    %c0_i32_1 = arith.constant 0 : i32
    return %c0_i32, %c0_i32_0 : i32, i32
  }
  func.func @transform_10(%arg0: i32, %arg1: i32) -> (i32, i32) {
    %c0_i32 = arith.constant 0 : i32
    %c0_i32_0 = arith.constant 0 : i32
    %c0_i32_1 = arith.constant 0 : i32
    return %c0_i32, %c0_i32_0 : i32, i32
  }
  func.func @transform_11(%arg0: i32, %arg1: i32) -> (i32, i32) {
    %c0_i32 = arith.constant 0 : i32
    %c0_i32_0 = arith.constant 0 : i32
    %c0_i32_1 = arith.constant 0 : i32
    return %c0_i32, %c0_i32_0 : i32, i32
  }
  func.func @transform_12(%arg0: i32, %arg1: i32) -> (i32, i32, i32) {
    %c0_i32 = arith.constant 0 : i32
    %c0_i32_0 = arith.constant 0 : i32
    return %arg0, %c0_i32, %arg1 : i32, i32, i32
  }
}

</mosaic_0001>

<llo_original>
// kernel: shufflev2_downsample.2
$region0: #{shufflev2_downsample.2}
  #allocation0 [shape = 'u32[]', space=smem, size = 0x4, offset = 0x4, fixed_abs, tag = 'smem constant byte address 0x4 - core index']
  #allocation1 [shape = 'u32[144,128]{1,0:T(1,128)}', space=vmem, size = 0x12000, scoped, tag = 'internal scratch']
  %s0 = inlined_call_operand.vmem [shape: f32[2,4,256], index: 0, kind: input, shape index: {}]
  %s1 = inlined_call_operand.vmem [shape: f32[2,4], index: 1, kind: input, shape index: {}]
  %s2 = inlined_call_operand.vmem [shape: f32[2,1], index: 2, kind: input, shape index: {}]
  %s3 = inlined_call_operand.vmem [shape: f32[2,1], index: 3, kind: input, shape index: {}]
  %s4 = inlined_call_operand.vmem [shape: f32[2,2,256], index: 4, kind: output, shape index: {}]
  %s5 = sld [smem:[#allocation0]]
  $region49: #{shufflev2_downsample.2} parent=0
    _
  %s7 = ssub.s32 1, %s5
  %s8 = scalar_select 0, %s7, %s5
  loop: start=0, step=1, limit=4
  $region2: #{shufflev2_downsample.2} parent=0 // loop_pre_header
    _
  $region3: #{shufflev2_downsample.2} parent=0 // loop_header
    %s10 = sphi 0, %s14
    %p11 = scmp.ge.s32.totalorder %s10, 4
    %s17 = sphi 0, %s29
    %s18 = sphi 0, %s25
    %s19 = sphi 0, %s17
    %s20 = sphi 0, %s18
    %s21 = sphi 0, %s19
    %s22 = sphi 0, %s20
    %s34 = sphi 0, %s36
    %s37 = sphi 0, %s34
    %s38 = sphi 0, %s37
    %s54 = sphi 0, %s38
    %s58 = sphi 0, %s58
    %s60 = sphi 0, %s58
    %s61 = sphi 0, %s60
    %s75 = sphi 0, %s61
    %s79 = sphi 0, %s79
    %s81 = sphi 0, %s79
    %s82 = sphi 0, %s81
    %s96 = sphi 0, %s82
    %s100 = sphi 0, %s100
    %s102 = sphi 0, %s100
    %s103 = sphi 0, %s102
    %s117 = sphi 0, %s103
    %s125 = sphi 0, %s127
    %s128 = sphi 0, %s125
    %s129 = sphi 0, %s128
    %s145 = sphi 0, %s129
  $region4: #{shufflev2_downsample.2} parent=0 // loop_header_branch
    %13 = sbr.rel (%p11) target = $region8
  $region5: #{shufflev2_downsample.2} parent=0 // loop_body
    %s15 = ssub.s32 %s10, 1
    %s16 = ssub.s32 %s10, 2
    %s23 = sadd.s32 1, %s18
    %p24 = scmp.ge.s32.totalorder %s23, 1
    %s25 = scalar_select %p24, 0, %s23
    %s26 = sadd.s32 1, %s17
    %s27 = scalar_select %p24, %s26, %s17
    %p28 = scmp.ge.s32.totalorder %s27, 2
    %s29 = scalar_select %p28, 0, %s27
    %s30 = ssub.s32 %s17, %s29
    %s31 = ssub.s32 %s18, %s25
    %s32 = sor.u32 %s30, %s31
    %p33 = scmp.eq.s32.totalorder %s32, 0
    %s35 = sadd.s32 %s34, 1
    %s36 = scalar_select %p33, %s34, %s35
    %p39 = pneg %p33
    %p40 = scmp.eq.s32.totalorder %s10, 1
    %p41 = por %p39, %p40
    %p42 = scmp.ne.s32.totalorder %s34, %s37
    %p43 = scmp.eq.s32.totalorder %s10, 0
    %p44 = por %p42, %p43
    %p45 = scmp.ne.s32.totalorder %s34, %s37
    %p46 = scmp.eq.s32.totalorder %s15, 1
    %p47 = por %p45, %p46
    %p48 = scmp.ne.s32.totalorder %s37, %s38
    %p49 = scmp.eq.s32.totalorder %s15, 0
    %p50 = por %p48, %p49
    %p51 = scmp.ne.s32.totalorder %s37, %s38
    %p52 = scmp.eq.s32.totalorder %s16, 1
    %p53 = por %p51, %p52
    %p55 = scmp.ne.s32.totalorder %s38, %s54
    %p56 = scmp.eq.s32.totalorder %s16, 0
    %p57 = por %p55, %p56
    %s59 = sadd.s32 %s58, 1
    %p62 = scmp.eq.s32.totalorder %s10, 1
    %p63 = scmp.ne.s32.totalorder %s58, %s60
    %p64 = scmp.eq.s32.totalorder %s10, 0
    %p65 = por %p63, %p64
    %p66 = scmp.ne.s32.totalorder %s58, %s60
    %p67 = scmp.eq.s32.totalorder %s15, 1
    %p68 = por %p66, %p67
    %p69 = scmp.ne.s32.totalorder %s60, %s61
    %p70 = scmp.eq.s32.totalorder %s15, 0
    %p71 = por %p69, %p70
    %p72 = scmp.ne.s32.totalorder %s60, %s61
    %p73 = scmp.eq.s32.totalorder %s16, 1
    %p74 = por %p72, %p73
    %p76 = scmp.ne.s32.totalorder %s61, %s75
    %p77 = scmp.eq.s32.totalorder %s16, 0
    %p78 = por %p76, %p77
    %s80 = sadd.s32 %s79, 1
    %p83 = scmp.eq.s32.totalorder %s10, 1
    %p84 = scmp.ne.s32.totalorder %s79, %s81
    %p85 = scmp.eq.s32.totalorder %s10, 0
    %p86 = por %p84, %p85
    %p87 = scmp.ne.s32.totalorder %s79, %s81
    %p88 = scmp.eq.s32.totalorder %s15, 1
    %p89 = por %p87, %p88
    %p90 = scmp.ne.s32.totalorder %s81, %s82
    %p91 = scmp.eq.s32.totalorder %s15, 0
    %p92 = por %p90, %p91
    %p93 = scmp.ne.s32.totalorder %s81, %s82
    %p94 = scmp.eq.s32.totalorder %s16, 1
    %p95 = por %p93, %p94
    %p97 = scmp.ne.s32.totalorder %s82, %s96
    %p98 = scmp.eq.s32.totalorder %s16, 0
    %p99 = por %p97, %p98
    %s101 = sadd.s32 %s100, 1
    %p104 = scmp.eq.s32.totalorder %s10, 1
    %p105 = scmp.ne.s32.totalorder %s100, %s102
    %p106 = scmp.eq.s32.totalorder %s10, 0
    %p107 = por %p105, %p106
    %p108 = scmp.ne.s32.totalorder %s100, %s102
    %p109 = scmp.eq.s32.totalorder %s15, 1
    %p110 = por %p108, %p109
    %p111 = scmp.ne.s32.totalorder %s102, %s103
    %p112 = scmp.eq.s32.totalorder %s15, 0
    %p113 = por %p111, %p112
    %p114 = scmp.ne.s32.totalorder %s102, %s103
    %p115 = scmp.eq.s32.totalorder %s16, 1
    %p116 = por %p114, %p115
    %p118 = scmp.ne.s32.totalorder %s103, %s117
    %p119 = scmp.eq.s32.totalorder %s16, 0
    %p120 = por %p118, %p119
    %s121 = ssub.s32 %s17, %s29
    %s122 = ssub.s32 %s18, %s25
    %s123 = sor.u32 %s121, %s122
    %p124 = scmp.eq.s32.totalorder %s123, 0
    %s126 = sadd.s32 %s125, 1
    %s127 = scalar_select %p124, %s125, %s126
    %p130 = pneg %p124
    %p131 = scmp.eq.s32.totalorder %s10, 1
    %p132 = por %p130, %p131
    %p133 = scmp.ne.s32.totalorder %s125, %s128
    %p134 = scmp.eq.s32.totalorder %s10, 0
    %p135 = por %p133, %p134
    %p136 = scmp.ne.s32.totalorder %s125, %s128
    %p137 = scmp.eq.s32.totalorder %s15, 1
    %p138 = por %p136, %p137
    %p139 = scmp.ne.s32.totalorder %s128, %s129
    %p140 = scmp.eq.s32.totalorder %s15, 0
    %p141 = por %p139, %p140
    %p142 = scmp.ne.s32.totalorder %s128, %s129
    %p143 = scmp.eq.s32.totalorder %s16, 1
    %p144 = por %p142, %p143
    %p146 = scmp.ne.s32.totalorder %s129, %s145
    %p147 = scmp.eq.s32.totalorder %s16, 0
    %p148 = por %p146, %p147
    %p149 = scmp.le.s32.totalorder 1, %s10
    %p150 = scmp.lt.s32.totalorder %s10, 3
    %p151 = pnand %p149, %p150
    %p152 = pneg %p151
    // Predicated region
    $region9: #{shufflev2_downsample.2} parent=5 // pred_check
      _
    $region10: #{shufflev2_downsample.2} parent=5 // pred_check_branch
      %154 = sbr.rel (%p151) target = $region12
    $region11: #{shufflev2_downsample.2} parent=5 // pred_region
      %s155 = ssub.s32 %s10, 1
      // Predicated region
      $region13: #{shufflev2_downsample.2} parent=11 // pred_check
        %p156 = pneg %p71
      $region14: #{shufflev2_downsample.2} parent=11 // pred_check_branch
        %158 = sbr.rel (%p156) target = $region16
      $region15: #{shufflev2_downsample.2} parent=11 // pred_region
        _
      $region16: #{shufflev2_downsample.2} parent=11 // pred_fallthru
        _
      // Predicated region
      $region17: #{shufflev2_downsample.2} parent=11 // pred_check
        %p159 = pneg %p92
      $region18: #{shufflev2_downsample.2} parent=11 // pred_check_branch
        %161 = sbr.rel (%p159) target = $region20
      $region19: #{shufflev2_downsample.2} parent=11 // pred_region
        _
      $region20: #{shufflev2_downsample.2} parent=11 // pred_fallthru
        _
      // Predicated region
      $region21: #{shufflev2_downsample.2} parent=11 // pred_check
        %p162 = pneg %p113
      $region22: #{shufflev2_downsample.2} parent=11 // pred_check_branch
        %164 = sbr.rel (%p162) target = $region24
      $region23: #{shufflev2_downsample.2} parent=11 // pred_region
        _
      $region24: #{shufflev2_downsample.2} parent=11 // pred_fallthru
        _
    $region12: #{shufflev2_downsample.2} parent=5 // pred_fallthru
      _
    %p165 = scmp.lt.s32.totalorder %s10, 2
    // Predicated region
    $region25: #{shufflev2_downsample.2} parent=5 // pred_check
      %p166 = pneg %p165
    $region26: #{shufflev2_downsample.2} parent=5 // pred_check_branch
      %168 = sbr.rel (%p166) target = $region28
    $region27: #{shufflev2_downsample.2} parent=5 // pred_region
      // Predicated region
      $region29: #{shufflev2_downsample.2} parent=27 // pred_check
        %p169 = pneg %p44
      $region30: #{shufflev2_downsample.2} parent=27 // pred_check_branch
        %171 = sbr.rel (%p169) target = $region32
      $region31: #{shufflev2_downsample.2} parent=27 // pred_region
        %s172 = smul.u32 2, %s18
        %p173 = scmp.lt.s32.totalorder %s17, 1
        %s174 = scalar_select %p173, %s17, 1
        %p175 = scmp.lt.s32.totalorder %s172, 1
        %s176 = scalar_select %p175, %s172, 1
        %s177 = smul.addr %s174, 2
        %s178 = sadd.s32 %s176, %s177
        %s179 = smul.addr %s178, 4
        %s180 = scalar_lea.vmem %s0, %s179
        %s181 = smul.u32 2, %s18
      $region32: #{shufflev2_downsample.2} parent=27 // pred_fallthru
        _
    $region28: #{shufflev2_downsample.2} parent=5 // pred_fallthru
      _
    %p182 = scmp.le.s32.totalorder 1, %s10
    %p183 = scmp.lt.s32.totalorder %s10, 3
    %p184 = pnand %p182, %p183
    %p185 = pneg %p184
    // Predicated region
    $region33: #{shufflev2_downsample.2} parent=5 // pred_check
      _
    $region34: #{shufflev2_downsample.2} parent=5 // pred_check_branch
      %187 = sbr.rel (%p184) target = $region36
    $region35: #{shufflev2_downsample.2} parent=5 // pred_region
      %s188 = ssub.s32 %s10, 1
      %s189 = smul.u32 2, %s20
      %p190 = scmp.lt.s32.totalorder %s19, 1
      %s191 = scalar_select %p190, %s19, 1
      %p192 = scmp.lt.s32.totalorder %s189, 1
      %s193 = scalar_select %p192, %s189, 1
      %s194 = smul.addr %s191, 2
      %s195 = sadd.s32 %s193, %s194
      %s196 = smul.addr %s195, 4
      %s197 = scalar_lea.vmem %s0, %s196
      %p198 = pneg %p50
      %p199 = pneg %p47
      %p200 = pneg %p71
      %p201 = pneg %p68
      %p202 = pneg %p92
      %p203 = pneg %p89
      %p204 = pneg %p113
      %p205 = pneg %p110
      %p206 = pneg %p141
      %p207 = pneg %p138
      %s208 = smul.u32 2, %s20
      %p209 = scmp.lt.s32.totalorder %s19, 1
      %s210 = scalar_select %p209, %s19, 1
      %p211 = scmp.lt.s32.totalorder %s208, 1
      %s212 = scalar_select %p211, %s208, 1
      %s213 = smul.addr %s210, 2
      %s214 = sadd.s32 %s212, %s213
      %s215 = smul.addr %s214, 2
      %s216 = scalar_lea.vmem %s4, %s215
      %s217 = smul.u32 2, %s20
      %p218 = scmp.lt.s32.totalorder %s19, 1
      %s219 = scalar_select %p218, %s19, 1
      %p220 = scmp.lt.s32.totalorder %s217, 1
      %s221 = scalar_select %p220, %s217, 1
      %s222 = smul.addr %s219, 2
      %s223 = sadd.s32 %s221, %s222
      %s224 = smul.addr %s223, 4
      %s225 = scalar_lea.vmem %s0, %s224
      %s226 = smul.u32 2, %s20
      %s227 = smul.u32 2, %s20
      %p228 = scmp.lt.s32.totalorder %s19, 1
      %s229 = scalar_select %p228, %s19, 1
      %p230 = scmp.lt.s32.totalorder %s227, 1
      %s231 = scalar_select %p230, %s227, 1
      %s232 = smul.addr %s229, 2
      %s233 = sadd.s32 %s231, %s232
      %s234 = smul.addr %s233, 2
      %s235 = scalar_lea.vmem %s4, %s234
      %s236 = smul.u32 2, %s20
      %v237 = vld [vmem:[%s1] sm:$0x3]
      %v238 = vld [vmem:[%s225] sm:$0xff]
      %v240 = vcombine.high %v238, %v238
      %vm241 = vcmask 31744
      %v243 = vsel %vm241, %v237, 0
      %vm245 = vcmask 1043456
      %v246 = vsel %vm245, %v238, 0
      %v248 = vsel %vm245, %v240, 0
      %250 = vmatprep.subr.mxu0 %v248
      %251 = vmatpush1.msra.mxu0 %v246
      %252 = vmatprep.subr.mxu0 0.0
      %253 = vmatpush1.msra.mxu0 0.0
      %254 = vmatprep.subr.mxu0 0.0
      %255 = vmatpush1.msra.mxu0 0.0
      %256 = vmatprep.subr.mxu0 0.0
      %257 = vmatpush1.msra.mxu0 0.0
      %258 = vmatprep.subr.mxu0 0.0
      %259 = vmatpush1.msra.mxu0 0.0
      %260 = vmatprep.subr.mxu0 0.0
      %261 = vmatpush1.msra.mxu0 0.0
      %262 = vmatprep.subr.mxu0 0.0
      %263 = vmatpush1.msra.mxu0 0.0
      %264 = vmatprep.subr.mxu0 0.0
      %265 = vmatpush1.msra.mxu0 0.0
      %266 = vmatprep.subr.mxu0 0.0
      %267 = vmatpush1.msra.mxu0 0.0
      %268 = vmatprep.subr.mxu0 0.0
      %269 = vmatpush1.msra.mxu0 0.0
      %270 = vmatprep.subr.mxu0 0.0
      %271 = vmatpush1.msra.mxu0 0.0
      %272 = vmatprep.subr.mxu0 0.0
      %273 = vmatpush1.msra.mxu0 0.0
      %274 = vmatprep.subr.mxu0 0.0
      %275 = vmatpush1.msra.mxu0 0.0
      %276 = vmatprep.subr.mxu0 0.0
      %277 = vmatpush1.msra.mxu0 0.0
      %278 = vmatprep.subr.mxu0 0.0
      %279 = vmatpush1.msra.mxu0 0.0
      %280 = vmatprep.subr.mxu0 0.0
      %281 = vmatpush1.msra.mxu0 0.0
      %282 = vmatprep.subr.mxu0 0.0
      %283 = vmatpush1.msra.mxu0 0.0
      %284 = vmatprep.subr.mxu0 0.0
      %285 = vmatpush1.msra.mxu0 0.0
      %286 = vmatprep.subr.mxu0 0.0
      %287 = vmatpush1.msra.mxu0 0.0
      %288 = vmatprep.subr.mxu0 0.0
      %289 = vmatpush1.msra.mxu0 0.0
      %290 = vmatprep.subr.mxu0 0.0
      %291 = vmatpush1.msra.mxu0 0.0
      %292 = vmatprep.subr.mxu0 0.0
      %293 = vmatpush1.msra.mxu0 0.0
      %294 = vmatprep.subr.mxu0 0.0
      %295 = vmatpush1.msra.mxu0 0.0
      %296 = vmatprep.subr.mxu0 0.0
      %297 = vmatpush1.msra.mxu0 0.0
      %298 = vmatprep.subr.mxu0 0.0
      %299 = vmatpush1.msra.mxu0 0.0
      %300 = vmatprep.subr.mxu0 0.0
      %301 = vmatpush1.msra.mxu0 0.0
      %302 = vmatprep.subr.mxu0 0.0
      %303 = vmatpush1.msra.mxu0 0.0
      %304 = vmatprep.subr.mxu0 0.0
      %305 = vmatpush1.msra.mxu0 0.0
      %306 = vmatprep.subr.mxu0 0.0
      %307 = vmatpush1.msra.mxu0 0.0
      %308 = vmatprep.subr.mxu0 0.0
      %309 = vmatpush1.msra.mxu0 0.0
      %310 = vmatprep.subr.mxu0 0.0
      %311 = vmatpush1.msra.mxu0 0.0
      %312 = vmatprep.subr.mxu0 0.0
      %313 = vmatpush1.msra.mxu0 0.0
      %314 = vmatprep.mubr.f32.mxu0 0.0
      %315 = vmatmul.mubr.f32.gmra.mrb[0].mxu0 %v243
      %v316 = vpop.f32.mrb[0].mxu0
      %v317 = vadd.f32 0.0, %v316
      %v318 = vpop.f32.mrb[0].mxu0
      %v319 = vadd.f32 0.0, %v318
      %320 = vdwg.mxu0
      %v321 = vld [vmem:[%s2] sm:$0x3]
      %323 = vset.pattern.permute.xlu0 0
      %324 = vperm.xlu0 %323, %v321
      %v325 = vpop.permute.xlu0 %324
      %v327 = vmul.f32 %v317, %v325
      %v328 = vmul.f32 %v319, %v325
      %v329 = vld [vmem:[%s3] sm:$0x3]
      %331 = vset.pattern.permute.xlu0 0
      %332 = vperm.xlu0 %331, %v329
      %v333 = vpop.permute.xlu0 %332
      %v335 = vadd.f32 %v327, %v333
      %v336 = vadd.f32 %v328, %v333
      %v337 = vadd.f32 %v335, 3.0
      %v338 = vadd.f32 %v336, 3.0
      %v339 = vmul.f32 %v337, 0.16666667
      %v340 = vmul.f32 %v338, 0.16666667
      %v341 = vmax.f32 %v339, 0.0
      %v342 = vmax.f32 %v340, 0.0
      %v343 = vmin.f32 %v341, 1.0
      %v344 = vmin.f32 %v342, 1.0
      %v345 = vmul.f32 %v335, %v343
      %v346 = vmul.f32 %v336, %v344
      %v349 = vcombine.low %v345, %v346
      %v351 = vunpack.c.l.s4 1983009808
      %v352 = vunpack.c.0.s8 %v351
      %v353 = vlaneseq
      %v354 = vshrl.u32 %v353, 7
      %v355 = vsub.s32 %v352, %v354
      %v356 = vrot.slane %v349, %v355
      %358 = vst [vmem:[%s235] sm:$0xf] %v356
      %s359 = smul.u32 2, %s20
      %p360 = scmp.lt.s32.totalorder %s19, 1
      %s361 = scalar_select %p360, %s19, 1
      %p362 = scmp.lt.s32.totalorder %s359, 1
      %s363 = scalar_select %p362, %s359, 1
      %s364 = smul.addr %s361, 2
      %s365 = sadd.s32 %s363, %s364
      %s366 = smul.addr %s365, 2
      %s367 = scalar_lea.vmem %s4, %s366
      // Predicated region
      $region37: #{shufflev2_downsample.2} parent=35 // pred_check
        %p368 = pneg %p138
      $region38: #{shufflev2_downsample.2} parent=35 // pred_check_branch
        %370 = sbr.rel (%p368) target = $region40
      $region39: #{shufflev2_downsample.2} parent=35 // pred_region
        %s371 = smul.u32 2, %s20
      $region40: #{shufflev2_downsample.2} parent=35 // pred_fallthru
        _
    $region36: #{shufflev2_downsample.2} parent=5 // pred_fallthru
      _
    %p372 = scmp.le.s32.totalorder 2, %s10
    // Predicated region
    $region41: #{shufflev2_downsample.2} parent=5 // pred_check
      %p373 = pneg %p372
    $region42: #{shufflev2_downsample.2} parent=5 // pred_check_branch
      %375 = sbr.rel (%p373) target = $region44
    $region43: #{shufflev2_downsample.2} parent=5 // pred_region
      %s376 = ssub.s32 %s10, 2
      // Predicated region
      $region45: #{shufflev2_downsample.2} parent=43 // pred_check
        %p377 = pneg %p144
      $region46: #{shufflev2_downsample.2} parent=43 // pred_check_branch
        %379 = sbr.rel (%p377) target = $region48
      $region47: #{shufflev2_downsample.2} parent=43 // pred_region
        %s380 = smul.u32 2, %s22
        %p381 = scmp.lt.s32.totalorder %s21, 1
        %s382 = scalar_select %p381, %s21, 1
        %p383 = scmp.lt.s32.totalorder %s380, 1
        %s384 = scalar_select %p383, %s380, 1
        %s385 = smul.addr %s382, 2
        %s386 = sadd.s32 %s384, %s385
        %s387 = smul.addr %s386, 2
        %s388 = scalar_lea.vmem %s4, %s387
      $region48: #{shufflev2_downsample.2} parent=43 // pred_fallthru
        _
    $region44: #{shufflev2_downsample.2} parent=5 // pred_fallthru
      _
  $region6: #{shufflev2_downsample.2} parent=0 // loop_footer
    %s14 = sadd.s32 1, %s10
  $region7: #{shufflev2_downsample.2} parent=0 // loop_footer_branch
    %9 = sbr.rel target = $region3
  $region8: #{shufflev2_downsample.2} parent=0 // loop_exit
    _

// kernel: shufflev2_downsample.3
$region0: #{shufflev2_downsample.3}
  #allocation0 [shape = 'u32[]', space=smem, size = 0x4, offset = 0x4, fixed_abs, tag = 'smem constant byte address 0x4 - core index']
  #allocation1 [shape = 'u32[144,128]{1,0:T(1,128)}', space=vmem, size = 0x12000, scoped, tag = 'internal scratch']
  %s0 = inlined_call_operand.vmem [shape: f32[9,2,4,128], index: 0, kind: input, shape index: {}]
  %s1 = inlined_call_operand.vmem [shape: f32[9,2,2,128], index: 1, kind: input, shape index: {}]
  %s2 = inlined_call_operand.vmem [shape: f32[9,4,1], index: 2, kind: input, shape index: {}]
  %s3 = inlined_call_operand.vmem [shape: f32[4,1], index: 3, kind: input, shape index: {}]
  %s4 = inlined_call_operand.vmem [shape: f32[4,1], index: 4, kind: input, shape index: {}]
  %s5 = inlined_call_operand.vmem [shape: f32[9,2,1], index: 5, kind: input, shape index: {}]
  %s6 = inlined_call_operand.vmem [shape: f32[2,1], index: 6, kind: input, shape index: {}]
  %s7 = inlined_call_operand.vmem [shape: f32[2,1], index: 7, kind: input, shape index: {}]
  %s8 = inlined_call_operand.vmem [shape: f32[8,4], index: 8, kind: input, shape index: {}]
  %s9 = inlined_call_operand.vmem [shape: f32[8,2], index: 9, kind: input, shape index: {}]
  %s10 = inlined_call_operand.vmem [shape: f32[8,1], index: 10, kind: input, shape index: {}]
  %s11 = inlined_call_operand.vmem [shape: f32[8,1], index: 11, kind: input, shape index: {}]
  %s12 = inlined_call_operand.vmem [shape: f32[2,8,128], index: 12, kind: output, shape index: {}]
  %s13 = sld [smem:[#allocation0]]
  $region163: #{shufflev2_downsample.3} parent=0
    _
  %s15 = ssub.s32 1, %s13
  %s16 = scalar_select 0, %s15, %s13
  $region1: #{shufflev2_downsample.3} parent=0
    #allocation2 [shape = 'u8[36864]{0}', space=vmem, size = 0x9000, scoped, tag = 'input window, operand 0']
    #allocation3 [shape = 'u8[18432]{0}', space=vmem, size = 0x4800, scoped, tag = 'input window, operand 1']
    loop: start=0, step=1, limit=4
    $region2: #{shufflev2_downsample.3} parent=1 // loop_pre_header
      _
    $region3: #{shufflev2_downsample.3} parent=1 // loop_header
      %s18 = sphi 0, %s22
      %p19 = scmp.ge.s32.totalorder %s18, 4
      %s25 = sphi 0, %s37
      %s26 = sphi 0, %s33
      %s27 = sphi 0, %s25
      %s28 = sphi 0, %s26
      %s29 = sphi 0, %s27
      %s30 = sphi 0, %s28
      %s42 = sphi 0, %s44
      %s45 = sphi 0, %s42
      %s46 = sphi 0, %s45
      %s62 = sphi 0, %s46
      %s70 = sphi 0, %s72
      %s73 = sphi 0, %s70
      %s74 = sphi 0, %s73
      %s90 = sphi 0, %s74
      %s94 = sphi 0, %s94
      %s96 = sphi 0, %s94
      %s97 = sphi 0, %s96
      %s111 = sphi 0, %s97
      %s115 = sphi 0, %s115
      %s117 = sphi 0, %s115
      %s118 = sphi 0, %s117
      %s132 = sphi 0, %s118
      %s136 = sphi 0, %s136
      %s138 = sphi 0, %s136
      %s139 = sphi 0, %s138
      %s153 = sphi 0, %s139
      %s157 = sphi 0, %s157
      %s159 = sphi 0, %s157
      %s160 = sphi 0, %s159
      %s174 = sphi 0, %s160
      %s178 = sphi 0, %s178
      %s180 = sphi 0, %s178
      %s181 = sphi 0, %s180
      %s195 = sphi 0, %s181
      %s199 = sphi 0, %s199
      %s201 = sphi 0, %s199
      %s202 = sphi 0, %s201
      %s216 = sphi 0, %s202
      %s220 = sphi 0, %s220
      %s222 = sphi 0, %s220
      %s223 = sphi 0, %s222
      %s237 = sphi 0, %s223
      %s241 = sphi 0, %s241
      %s243 = sphi 0, %s241
      %s244 = sphi 0, %s243
      %s258 = sphi 0, %s244
      %s262 = sphi 0, %s262
      %s264 = sphi 0, %s262
      %s265 = sphi 0, %s264
      %s279 = sphi 0, %s265
      %s283 = sphi 0, %s283
      %s285 = sphi 0, %s283
      %s286 = sphi 0, %s285
      %s300 = sphi 0, %s286
      %s308 = sphi 0, %s310
      %s311 = sphi 0, %s308
      %s312 = sphi 0, %s311
      %s328 = sphi 0, %s312
    $region4: #{shufflev2_downsample.3} parent=1 // loop_header_branch
      %21 = sbr.rel (%p19) target = $region8
    $region5: #{shufflev2_downsample.3} parent=1 // loop_body
      %s23 = ssub.s32 %s18, 1
      %s24 = ssub.s32 %s18, 2
      %s31 = sadd.s32 1, %s26
      %p32 = scmp.ge.s32.totalorder %s31, 1
      %s33 = scalar_select %p32, 0, %s31
      %s34 = sadd.s32 1, %s25
      %s35 = scalar_select %p32, %s34, %s25
      %p36 = scmp.ge.s32.totalorder %s35, 2
      %s37 = scalar_select %p36, 0, %s35
      %s38 = ssub.s32 %s25, %s37
      %s39 = ssub.s32 %s26, %s33
      %s40 = sor.u32 %s38, %s39
      %p41 = scmp.eq.s32.totalorder %s40, 0
      %s43 = sadd.s32 %s42, 1
      %s44 = scalar_select %p41, %s42, %s43
      %p47 = pneg %p41
      %p48 = scmp.eq.s32.totalorder %s18, 1
      %p49 = por %p47, %p48
      %p50 = scmp.ne.s32.totalorder %s42, %s45
      %p51 = scmp.eq.s32.totalorder %s18, 0
      %p52 = por %p50, %p51
      %p53 = scmp.ne.s32.totalorder %s42, %s45
      %p54 = scmp.eq.s32.totalorder %s23, 1
      %p55 = por %p53, %p54
      %p56 = scmp.ne.s32.totalorder %s45, %s46
      %p57 = scmp.eq.s32.totalorder %s23, 0
      %p58 = por %p56, %p57
      %p59 = scmp.ne.s32.totalorder %s45, %s46
      %p60 = scmp.eq.s32.totalorder %s24, 1
      %p61 = por %p59, %p60
      %p63 = scmp.ne.s32.totalorder %s46, %s62
      %p64 = scmp.eq.s32.totalorder %s24, 0
      %p65 = por %p63, %p64
      %s66 = ssub.s32 %s25, %s37
      %s67 = ssub.s32 %s26, %s33
      %s68 = sor.u32 %s66, %s67
      %p69 = scmp.eq.s32.totalorder %s68, 0
      %s71 = sadd.s32 %s70, 1
      %s72 = scalar_select %p69, %s70, %s71
      %p75 = pneg %p69
      %p76 = scmp.eq.s32.totalorder %s18, 1
      %p77 = por %p75, %p76
      %p78 = scmp.ne.s32.totalorder %s70, %s73
      %p79 = scmp.eq.s32.totalorder %s18, 0
      %p80 = por %p78, %p79
      %p81 = scmp.ne.s32.totalorder %s70, %s73
      %p82 = scmp.eq.s32.totalorder %s23, 1
      %p83 = por %p81, %p82
      %p84 = scmp.ne.s32.totalorder %s73, %s74
      %p85 = scmp.eq.s32.totalorder %s23, 0
      %p86 = por %p84, %p85
      %p87 = scmp.ne.s32.totalorder %s73, %s74
      %p88 = scmp.eq.s32.totalorder %s24, 1
      %p89 = por %p87, %p88
      %p91 = scmp.ne.s32.totalorder %s74, %s90
      %p92 = scmp.eq.s32.totalorder %s24, 0
      %p93 = por %p91, %p92
      %s95 = sadd.s32 %s94, 1
      %p98 = scmp.eq.s32.totalorder %s18, 1
      %p99 = scmp.ne.s32.totalorder %s94, %s96
      %p100 = scmp.eq.s32.totalorder %s18, 0
      %p101 = por %p99, %p100
      %p102 = scmp.ne.s32.totalorder %s94, %s96
      %p103 = scmp.eq.s32.totalorder %s23, 1
      %p104 = por %p102, %p103
      %p105 = scmp.ne.s32.totalorder %s96, %s97
      %p106 = scmp.eq.s32.totalorder %s23, 0
      %p107 = por %p105, %p106
      %p108 = scmp.ne.s32.totalorder %s96, %s97
      %p109 = scmp.eq.s32.totalorder %s24, 1
      %p110 = por %p108, %p109
      %p112 = scmp.ne.s32.totalorder %s97, %s111
      %p113 = scmp.eq.s32.totalorder %s24, 0
      %p114 = por %p112, %p113
      %s116 = sadd.s32 %s115, 1
      %p119 = scmp.eq.s32.totalorder %s18, 1
      %p120 = scmp.ne.s32.totalorder %s115, %s117
      %p121 = scmp.eq.s32.totalorder %s18, 0
      %p122 = por %p120, %p121
      %p123 = scmp.ne.s32.totalorder %s115, %s117
      %p124 = scmp.eq.s32.totalorder %s23, 1
      %p125 = por %p123, %p124
      %p126 = scmp.ne.s32.totalorder %s117, %s118
      %p127 = scmp.eq.s32.totalorder %s23, 0
      %p128 = por %p126, %p127
      %p129 = scmp.ne.s32.totalorder %s117, %s118
      %p130 = scmp.eq.s32.totalorder %s24, 1
      %p131 = por %p129, %p130
      %p133 = scmp.ne.s32.totalorder %s118, %s132
      %p134 = scmp.eq.s32.totalorder %s24, 0
      %p135 = por %p133, %p134
      %s137 = sadd.s32 %s136, 1
      %p140 = scmp.eq.s32.totalorder %s18, 1
      %p141 = scmp.ne.s32.totalorder %s136, %s138
      %p142 = scmp.eq.s32.totalorder %s18, 0
      %p143 = por %p141, %p142
      %p144 = scmp.ne.s32.totalorder %s136, %s138
      %p145 = scmp.eq.s32.totalorder %s23, 1
      %p146 = por %p144, %p145
      %p147 = scmp.ne.s32.totalorder %s138, %s139
      %p148 = scmp.eq.s32.totalorder %s23, 0
      %p149 = por %p147, %p148
      %p150 = scmp.ne.s32.totalorder %s138, %s139
      %p151 = scmp.eq.s32.totalorder %s24, 1
      %p152 = por %p150, %p151
      %p154 = scmp.ne.s32.totalorder %s139, %s153
      %p155 = scmp.eq.s32.totalorder %s24, 0
      %p156 = por %p154, %p155
      %s158 = sadd.s32 %s157, 1
      %p161 = scmp.eq.s32.totalorder %s18, 1
      %p162 = scmp.ne.s32.totalorder %s157, %s159
      %p163 = scmp.eq.s32.totalorder %s18, 0
      %p164 = por %p162, %p163
      %p165 = scmp.ne.s32.totalorder %s157, %s159
      %p166 = scmp.eq.s32.totalorder %s23, 1
      %p167 = por %p165, %p166
      %p168 = scmp.ne.s32.totalorder %s159, %s160
      %p169 = scmp.eq.s32.totalorder %s23, 0
      %p170 = por %p168, %p169
      %p171 = scmp.ne.s32.totalorder %s159, %s160
      %p172 = scmp.eq.s32.totalorder %s24, 1
      %p173 = por %p171, %p172
      %p175 = scmp.ne.s32.totalorder %s160, %s174
      %p176 = scmp.eq.s32.totalorder %s24, 0
      %p177 = por %p175, %p176
      %s179 = sadd.s32 %s178, 1
      %p182 = scmp.eq.s32.totalorder %s18, 1
      %p183 = scmp.ne.s32.totalorder %s178, %s180
      %p184 = scmp.eq.s32.totalorder %s18, 0
      %p185 = por %p183, %p184
      %p186 = scmp.ne.s32.totalorder %s178, %s180
      %p187 = scmp.eq.s32.totalorder %s23, 1
      %p188 = por %p186, %p187
      %p189 = scmp.ne.s32.totalorder %s180, %s181
      %p190 = scmp.eq.s32.totalorder %s23, 0
      %p191 = por %p189, %p190
      %p192 = scmp.ne.s32.totalorder %s180, %s181
      %p193 = scmp.eq.s32.totalorder %s24, 1
      %p194 = por %p192, %p193
      %p196 = scmp.ne.s32.totalorder %s181, %s195
      %p197 = scmp.eq.s32.totalorder %s24, 0
      %p198 = por %p196, %p197
      %s200 = sadd.s32 %s199, 1
      %p203 = scmp.eq.s32.totalorder %s18, 1
      %p204 = scmp.ne.s32.totalorder %s199, %s201
      %p205 = scmp.eq.s32.totalorder %s18, 0
      %p206 = por %p204, %p205
      %p207 = scmp.ne.s32.totalorder %s199, %s201
      %p208 = scmp.eq.s32.totalorder %s23, 1
      %p209 = por %p207, %p208
      %p210 = scmp.ne.s32.totalorder %s201, %s202
      %p211 = scmp.eq.s32.totalorder %s23, 0
      %p212 = por %p210, %p211
      %p213 = scmp.ne.s32.totalorder %s201, %s202
      %p214 = scmp.eq.s32.totalorder %s24, 1
      %p215 = por %p213, %p214
      %p217 = scmp.ne.s32.totalorder %s202, %s216
      %p218 = scmp.eq.s32.totalorder %s24, 0
      %p219 = por %p217, %p218
      %s221 = sadd.s32 %s220, 1
      %p224 = scmp.eq.s32.totalorder %s18, 1
      %p225 = scmp.ne.s32.totalorder %s220, %s222
      %p226 = scmp.eq.s32.totalorder %s18, 0
      %p227 = por %p225, %p226
      %p228 = scmp.ne.s32.totalorder %s220, %s222
      %p229 = scmp.eq.s32.totalorder %s23, 1
      %p230 = por %p228, %p229
      %p231 = scmp.ne.s32.totalorder %s222, %s223
      %p232 = scmp.eq.s32.totalorder %s23, 0
      %p233 = por %p231, %p232
      %p234 = scmp.ne.s32.totalorder %s222, %s223
      %p235 = scmp.eq.s32.totalorder %s24, 1
      %p236 = por %p234, %p235
      %p238 = scmp.ne.s32.totalorder %s223, %s237
      %p239 = scmp.eq.s32.totalorder %s24, 0
      %p240 = por %p238, %p239
      %s242 = sadd.s32 %s241, 1
      %p245 = scmp.eq.s32.totalorder %s18, 1
      %p246 = scmp.ne.s32.totalorder %s241, %s243
      %p247 = scmp.eq.s32.totalorder %s18, 0
      %p248 = por %p246, %p247
      %p249 = scmp.ne.s32.totalorder %s241, %s243
      %p250 = scmp.eq.s32.totalorder %s23, 1
      %p251 = por %p249, %p250
      %p252 = scmp.ne.s32.totalorder %s243, %s244
      %p253 = scmp.eq.s32.totalorder %s23, 0
      %p254 = por %p252, %p253
      %p255 = scmp.ne.s32.totalorder %s243, %s244
      %p256 = scmp.eq.s32.totalorder %s24, 1
      %p257 = por %p255, %p256
      %p259 = scmp.ne.s32.totalorder %s244, %s258
      %p260 = scmp.eq.s32.totalorder %s24, 0
      %p261 = por %p259, %p260
      %s263 = sadd.s32 %s262, 1
      %p266 = scmp.eq.s32.totalorder %s18, 1
      %p267 = scmp.ne.s32.totalorder %s262, %s264
      %p268 = scmp.eq.s32.totalorder %s18, 0
      %p269 = por %p267, %p268
      %p270 = scmp.ne.s32.totalorder %s262, %s264
      %p271 = scmp.eq.s32.totalorder %s23, 1
      %p272 = por %p270, %p271
      %p273 = scmp.ne.s32.totalorder %s264, %s265
      %p274 = scmp.eq.s32.totalorder %s23, 0
      %p275 = por %p273, %p274
      %p276 = scmp.ne.s32.totalorder %s264, %s265
      %p277 = scmp.eq.s32.totalorder %s24, 1
      %p278 = por %p276, %p277
      %p280 = scmp.ne.s32.totalorder %s265, %s279
      %p281 = scmp.eq.s32.totalorder %s24, 0
      %p282 = por %p280, %p281
      %s284 = sadd.s32 %s283, 1
      %p287 = scmp.eq.s32.totalorder %s18, 1
      %p288 = scmp.ne.s32.totalorder %s283, %s285
      %p289 = scmp.eq.s32.totalorder %s18, 0
      %p290 = por %p288, %p289
      %p291 = scmp.ne.s32.totalorder %s283, %s285
      %p292 = scmp.eq.s32.totalorder %s23, 1
      %p293 = por %p291, %p292
      %p294 = scmp.ne.s32.totalorder %s285, %s286
      %p295 = scmp.eq.s32.totalorder %s23, 0
      %p296 = por %p294, %p295
      %p297 = scmp.ne.s32.totalorder %s285, %s286
      %p298 = scmp.eq.s32.totalorder %s24, 1
      %p299 = por %p297, %p298
      %p301 = scmp.ne.s32.totalorder %s286, %s300
      %p302 = scmp.eq.s32.totalorder %s24, 0
      %p303 = por %p301, %p302
      %s304 = ssub.s32 %s25, %s37
      %s305 = ssub.s32 %s26, %s33
      %s306 = sor.u32 %s304, %s305
      %p307 = scmp.eq.s32.totalorder %s306, 0
      %s309 = sadd.s32 %s308, 1
      %s310 = scalar_select %p307, %s308, %s309
      %p313 = pneg %p307
      %p314 = scmp.eq.s32.totalorder %s18, 1
      %p315 = por %p313, %p314
      %p316 = scmp.ne.s32.totalorder %s308, %s311
      %p317 = scmp.eq.s32.totalorder %s18, 0
      %p318 = por %p316, %p317
      %p319 = scmp.ne.s32.totalorder %s308, %s311
      %p320 = scmp.eq.s32.totalorder %s23, 1
      %p321 = por %p319, %p320
      %p322 = scmp.ne.s32.totalorder %s311, %s312
      %p323 = scmp.eq.s32.totalorder %s23, 0
      %p324 = por %p322, %p323
      %p325 = scmp.ne.s32.totalorder %s311, %s312
      %p326 = scmp.eq.s32.totalorder %s24, 1
      %p327 = por %p325, %p326
      %p329 = scmp.ne.s32.totalorder %s312, %s328
      %p330 = scmp.eq.s32.totalorder %s24, 0
      %p331 = por %p329, %p330
      %p332 = scmp.le.s32.totalorder 1, %s18
      %p333 = scmp.lt.s32.totalorder %s18, 3
      %p334 = pnand %p332, %p333
      %p335 = pneg %p334
      // Predicated region
      $region9: #{shufflev2_downsample.3} parent=5 // pred_check
        _
      $region10: #{shufflev2_downsample.3} parent=5 // pred_check_branch
        %337 = sbr.rel (%p334) target = $region12
      $region11: #{shufflev2_downsample.3} parent=5 // pred_region
        %s338 = ssub.s32 %s18, 1
        // Predicated region
        $region13: #{shufflev2_downsample.3} parent=11 // pred_check
          %p339 = pneg %p107
        $region14: #{shufflev2_downsample.3} parent=11 // pred_check_branch
          %341 = sbr.rel (%p339) target = $region16
        $region15: #{shufflev2_downsample.3} parent=11 // pred_region
          _
        $region16: #{shufflev2_downsample.3} parent=11 // pred_fallthru
          _
        // Predicated region
        $region17: #{shufflev2_downsample.3} parent=11 // pred_check
          %p342 = pneg %p128
        $region18: #{shufflev2_downsample.3} parent=11 // pred_check_branch
          %344 = sbr.rel (%p342) target = $region20
        $region19: #{shufflev2_downsample.3} parent=11 // pred_region
          _
        $region20: #{shufflev2_downsample.3} parent=11 // pred_fallthru
          _
        // Predicated region
        $region21: #{shufflev2_downsample.3} parent=11 // pred_check
          %p345 = pneg %p149
        $region22: #{shufflev2_downsample.3} parent=11 // pred_check_branch
          %347 = sbr.rel (%p345) target = $region24
        $region23: #{shufflev2_downsample.3} parent=11 // pred_region
          _
        $region24: #{shufflev2_downsample.3} parent=11 // pred_fallthru
          _
        // Predicated region
        $region25: #{shufflev2_downsample.3} parent=11 // pred_check
          %p348 = pneg %p170
        $region26: #{shufflev2_downsample.3} parent=11 // pred_check_branch
          %350 = sbr.rel (%p348) target = $region28
        $region27: #{shufflev2_downsample.3} parent=11 // pred_region
          _
        $region28: #{shufflev2_downsample.3} parent=11 // pred_fallthru
          _
        // Predicated region
        $region29: #{shufflev2_downsample.3} parent=11 // pred_check
          %p351 = pneg %p191
        $region30: #{shufflev2_downsample.3} parent=11 // pred_check_branch
          %353 = sbr.rel (%p351) target = $region32
        $region31: #{shufflev2_downsample.3} parent=11 // pred_region
          _
        $region32: #{shufflev2_downsample.3} parent=11 // pred_fallthru
          _
        // Predicated region
        $region33: #{shufflev2_downsample.3} parent=11 // pred_check
          %p354 = pneg %p212
        $region34: #{shufflev2_downsample.3} parent=11 // pred_check_branch
          %356 = sbr.rel (%p354) target = $region36
        $region35: #{shufflev2_downsample.3} parent=11 // pred_region
          _
        $region36: #{shufflev2_downsample.3} parent=11 // pred_fallthru
          _
        // Predicated region
        $region37: #{shufflev2_downsample.3} parent=11 // pred_check
          %p357 = pneg %p233
        $region38: #{shufflev2_downsample.3} parent=11 // pred_check_branch
          %359 = sbr.rel (%p357) target = $region40
        $region39: #{shufflev2_downsample.3} parent=11 // pred_region
          _
        $region40: #{shufflev2_downsample.3} parent=11 // pred_fallthru
          _
        // Predicated region
        $region41: #{shufflev2_downsample.3} parent=11 // pred_check
          %p360 = pneg %p254
        $region42: #{shufflev2_downsample.3} parent=11 // pred_check_branch
          %362 = sbr.rel (%p360) target = $region44
        $region43: #{shufflev2_downsample.3} parent=11 // pred_region
          _
        $region44: #{shufflev2_downsample.3} parent=11 // pred_fallthru
          _
        // Predicated region
        $region45: #{shufflev2_downsample.3} parent=11 // pred_check
          %p363 = pneg %p275
        $region46: #{shufflev2_downsample.3} parent=11 // pred_check_branch
          %365 = sbr.rel (%p363) target = $region48
        $region47: #{shufflev2_downsample.3} parent=11 // pred_region
          _
        $region48: #{shufflev2_downsample.3} parent=11 // pred_fallthru
          _
        // Predicated region
        $region49: #{shufflev2_downsample.3} parent=11 // pred_check
          %p366 = pneg %p296
        $region50: #{shufflev2_downsample.3} parent=11 // pred_check_branch
          %368 = sbr.rel (%p366) target = $region52
        $region51: #{shufflev2_downsample.3} parent=11 // pred_region
          _
        $region52: #{shufflev2_downsample.3} parent=11 // pred_fallthru
          _
      $region12: #{shufflev2_downsample.3} parent=5 // pred_fallthru
        _
      %p369 = scmp.lt.s32.totalorder %s18, 2
      // Predicated region
      $region53: #{shufflev2_downsample.3} parent=5 // pred_check
        %p370 = pneg %p369
      $region54: #{shufflev2_downsample.3} parent=5 // pred_check_branch
        %372 = sbr.rel (%p370) target = $region56
      $region55: #{shufflev2_downsample.3} parent=5 // pred_region
        // Predicated region
        $region57: #{shufflev2_downsample.3} parent=55 // pred_check
          %p373 = pneg %p52
        $region58: #{shufflev2_downsample.3} parent=55 // pred_check_branch
          %375 = sbr.rel (%p373) target = $region60
        $region59: #{shufflev2_downsample.3} parent=55 // pred_region
          %s376 = sand.u32 %s42, 1
          %s377 = sand.u32 %s42, 1
          %s378 = smul.addr %s377, 36
          %s379 = scalar_lea.vmem [#allocation2], %s378
          %s380 = sadd.s32 %s26, %s25
          %s381 = smul.addr %s380, 4
          %s382 = scalar_lea.vmem %s0, %s381
          // Predicated region
          $region61: #{shufflev2_downsample.3} parent=59 // pred_check
            _
          $region62: #{shufflev2_downsample.3} parent=59 // pred_check_branch
            %384 = sbr.rel (0) target = $region64
          $region63: #{shufflev2_downsample.3} parent=59 // pred_region
            // Predicated region
            $region65: #{shufflev2_downsample.3} parent=63 // pred_check
              _
            $region66: #{shufflev2_downsample.3} parent=63 // pred_check_branch
              %386 = sbr.rel target = $region68
            $region67: #{shufflev2_downsample.3} parent=63 // pred_region
              // Predicated region
              $region80: #{shufflev2_downsample.3} parent=67 // pred_check
                _
              $region81: #{shufflev2_downsample.3} parent=67 // pred_check_branch
                %417 = sbr.rel (0) target = $region83
              $region82: #{shufflev2_downsample.3} parent=67 // pred_region
                loop: start=0, step=1, limit=1
                $region84: #{shufflev2_downsample.3} parent=82 // loop_pre_header
                  _
                $region85: #{shufflev2_downsample.3} parent=82 // loop_header
                  %s419 = sphi 0, %s423
                  %p420 = scmp.ge.s32.totalorder %s419, 1
                  %s424 = sphi %s382, %s382
                  %s425 = sphi %s379, %s379
                $region86: #{shufflev2_downsample.3} parent=82 // loop_header_branch
                  %422 = sbr.rel (%p420) target = $region90
                $region87: #{shufflev2_downsample.3} parent=82 // loop_body
                  _
                $region88: #{shufflev2_downsample.3} parent=82 // loop_footer
                  %s423 = sadd.s32 1, %s419
                $region89: #{shufflev2_downsample.3} parent=82 // loop_footer_branch
                  %418 = sbr.rel target = $region85
                $region90: #{shufflev2_downsample.3} parent=82 // loop_exit
                  _
                loop: start=0, step=1, limit=1
                $region91: #{shufflev2_downsample.3} parent=82 // loop_pre_header
                  _
                $region92: #{shufflev2_downsample.3} parent=82 // loop_header
                  %s428 = sphi 0, %s432
                  %p429 = scmp.ge.s32.totalorder %s428, 1
                  %s433 = sphi %s382, %s382
                  %s434 = sphi %s379, %s379
                $region93: #{shufflev2_downsample.3} parent=82 // loop_header_branch
                  %431 = sbr.rel (%p429) target = $region97
                $region94: #{shufflev2_downsample.3} parent=82 // loop_body
                  %v435 = vld [vmem:[%s433] sm:$0xf]
                  %436 = vst [vmem:[%s434] sm:$0xf] %v435
                  %v437 = vld [vmem:[%s433 + $0x8] sm:$0xf]
                  %438 = vst [vmem:[%s434 + $0x4] sm:$0xf] %v437
                  %v439 = vld [vmem:[%s433 + $0x10] sm:$0xf]
                  %440 = vst [vmem:[%s434 + $0x8] sm:$0xf] %v439
                  %v441 = vld [vmem:[%s433 + $0x18] sm:$0xf]
                  %442 = vst [vmem:[%s434 + $0xc] sm:$0xf] %v441
                  %v443 = vld [vmem:[%s433 + $0x20] sm:$0xf]
                  %444 = vst [vmem:[%s434 + $0x10] sm:$0xf] %v443
                  %v445 = vld [vmem:[%s433 + $0x28] sm:$0xf]
                  %446 = vst [vmem:[%s434 + $0x14] sm:$0xf] %v445
                  %v447 = vld [vmem:[%s433 + $0x30] sm:$0xf]
                  %448 = vst [vmem:[%s434 + $0x18] sm:$0xf] %v447
                  %v449 = vld [vmem:[%s433 + $0x38] sm:$0xf]
                  %450 = vst [vmem:[%s434 + $0x1c] sm:$0xf] %v449
                  %v451 = vld [vmem:[%s433 + $0x40] sm:$0xf]
                  %452 = vst [vmem:[%s434 + $0x20] sm:$0xf] %v451
                $region95: #{shufflev2_downsample.3} parent=82 // loop_footer
                  %s432 = sadd.s32 1, %s428
                $region96: #{shufflev2_downsample.3} parent=82 // loop_footer_branch
                  %427 = sbr.rel target = $region92
                $region97: #{shufflev2_downsample.3} parent=82 // loop_exit
                  _
              $region83: #{shufflev2_downsample.3} parent=67 // pred_fallthru
                _
            $region68: #{shufflev2_downsample.3} parent=63 // pred_fallthru
              _
            // Predicated region
            $region69: #{shufflev2_downsample.3} parent=63 // pred_check
              _
            $region70: #{shufflev2_downsample.3} parent=63 // pred_check_branch
              %388 = sbr.rel (0) target = $region72
            $region71: #{shufflev2_downsample.3} parent=63 // pred_region
              loop: start=0, step=1, limit=1
              $region73: #{shufflev2_downsample.3} parent=71 // loop_pre_header
                _
              $region74: #{shufflev2_downsample.3} parent=71 // loop_header
                %s391 = sphi 0, %s395
                %p392 = scmp.ge.s32.totalorder %s391, 1
                %s396 = sphi %s382, %s382
                %s397 = sphi %s379, %s379
              $region75: #{shufflev2_downsample.3} parent=71 // loop_header_branch
                %394 = sbr.rel (%p392) target = $region79
              $region76: #{shufflev2_downsample.3} parent=71 // loop_body
                %v398 = vld [vmem:[%s396] sm:$0xf]
                %399 = vst [vmem:[%s397] sm:$0xf] %v398
                %v400 = vld [vmem:[%s396 + $0x8] sm:$0xf]
                %401 = vst [vmem:[%s397 + $0x4] sm:$0xf] %v400
                %v402 = vld [vmem:[%s396 + $0x10] sm:$0xf]
                %403 = vst [vmem:[%s397 + $0x8] sm:$0xf] %v402
                %v404 = vld [vmem:[%s396 + $0x18] sm:$0xf]
                %405 = vst [vmem:[%s397 + $0xc] sm:$0xf] %v404
                %v406 = vld [vmem:[%s396 + $0x20] sm:$0xf]
                %407 = vst [vmem:[%s397 + $0x10] sm:$0xf] %v406
                %v408 = vld [vmem:[%s396 + $0x28] sm:$0xf]
                %409 = vst [vmem:[%s397 + $0x14] sm:$0xf] %v408
                %v410 = vld [vmem:[%s396 + $0x30] sm:$0xf]
                %411 = vst [vmem:[%s397 + $0x18] sm:$0xf] %v410
                %v412 = vld [vmem:[%s396 + $0x38] sm:$0xf]
                %413 = vst [vmem:[%s397 + $0x1c] sm:$0xf] %v412
                %v414 = vld [vmem:[%s396 + $0x40] sm:$0xf]
                %415 = vst [vmem:[%s397 + $0x20] sm:$0xf] %v414
              $region77: #{shufflev2_downsample.3} parent=71 // loop_footer
                %s395 = sadd.s32 1, %s391
              $region78: #{shufflev2_downsample.3} parent=71 // loop_footer_branch
                %390 = sbr.rel target = $region74
              $region79: #{shufflev2_downsample.3} parent=71 // loop_exit
                _
            $region72: #{shufflev2_downsample.3} parent=63 // pred_fallthru
              _
          $region64: #{shufflev2_downsample.3} parent=59 // pred_fallthru
            _
          %453 = vnop
        $region60: #{shufflev2_downsample.3} parent=55 // pred_fallthru
          _
        // Predicated region
        $region98: #{shufflev2_downsample.3} parent=55 // pred_check
          %p454 = pneg %p80
        $region99: #{shufflev2_downsample.3} parent=55 // pred_check_branch
          %456 = sbr.rel (%p454) target = $region101
        $region100: #{shufflev2_downsample.3} parent=55 // pred_region
          %s457 = sand.u32 %s70, 1
          %s458 = sand.u32 %s70, 1
          %s459 = smul.addr %s458, 18
          %s460 = scalar_lea.vmem [#allocation3], %s459
          %s461 = sadd.s32 %s26, %s25
          %s462 = smul.addr %s461, 2
          %s463 = scalar_lea.vmem %s1, %s462
          // Predicated region
          $region102: #{shufflev2_downsample.3} parent=100 // pred_check
            _
          $region103: #{shufflev2_downsample.3} parent=100 // pred_check_branch
            %465 = sbr.rel (0) target = $region105
          $region104: #{shufflev2_downsample.3} parent=100 // pred_region
            // Predicated region
            $region106: #{shufflev2_downsample.3} parent=104 // pred_check
              _
            $region107: #{shufflev2_downsample.3} parent=104 // pred_check_branch
              %467 = sbr.rel target = $region109
            $region108: #{shufflev2_downsample.3} parent=104 // pred_region
              // Predicated region
              $region121: #{shufflev2_downsample.3} parent=108 // pred_check
                _
              $region122: #{shufflev2_downsample.3} parent=108 // pred_check_branch
                %498 = sbr.rel (0) target = $region124
              $region123: #{shufflev2_downsample.3} parent=108 // pred_region
                loop: start=0, step=1, limit=1
                $region125: #{shufflev2_downsample.3} parent=123 // loop_pre_header
                  _
                $region126: #{shufflev2_downsample.3} parent=123 // loop_header
                  %s500 = sphi 0, %s504
                  %p501 = scmp.ge.s32.totalorder %s500, 1
                  %s505 = sphi %s463, %s463
                  %s506 = sphi %s460, %s460
                $region127: #{shufflev2_downsample.3} parent=123 // loop_header_branch
                  %503 = sbr.rel (%p501) target = $region131
                $region128: #{shufflev2_downsample.3} parent=123 // loop_body
                  _
                $region129: #{shufflev2_downsample.3} parent=123 // loop_footer
                  %s504 = sadd.s32 1, %s500
                $region130: #{shufflev2_downsample.3} parent=123 // loop_footer_branch
                  %499 = sbr.rel target = $region126
                $region131: #{shufflev2_downsample.3} parent=123 // loop_exit
                  _
                loop: start=0, step=1, limit=1
                $region132: #{shufflev2_downsample.3} parent=123 // loop_pre_header
                  _
                $region133: #{shufflev2_downsample.3} parent=123 // loop_header
                  %s509 = sphi 0, %s513
                  %p510 = scmp.ge.s32.totalorder %s509, 1
                  %s514 = sphi %s463, %s463
                  %s515 = sphi %s460, %s460
                $region134: #{shufflev2_downsample.3} parent=123 // loop_header_branch
                  %512 = sbr.rel (%p510) target = $region138
                $region135: #{shufflev2_downsample.3} parent=123 // loop_body
                  %v516 = vld [vmem:[%s514] sm:$0x3]
                  %517 = vst [vmem:[%s515] sm:$0x3] %v516
                  %v518 = vld [vmem:[%s514 + $0x4] sm:$0x3]
                  %519 = vst [vmem:[%s515 + $0x2] sm:$0x3] %v518
                  %v520 = vld [vmem:[%s514 + $0x8] sm:$0x3]
                  %521 = vst [vmem:[%s515 + $0x4] sm:$0x3] %v520
                  %v522 = vld [vmem:[%s514 + $0xc] sm:$0x3]
                  %523 = vst [vmem:[%s515 + $0x6] sm:$0x3] %v522
                  %v524 = vld [vmem:[%s514 + $0x10] sm:$0x3]
                  %525 = vst [vmem:[%s515 + $0x8] sm:$0x3] %v524
                  %v526 = vld [vmem:[%s514 + $0x14] sm:$0x3]
                  %527 = vst [vmem:[%s515 + $0xa] sm:$0x3] %v526
                  %v528 = vld [vmem:[%s514 + $0x18] sm:$0x3]
                  %529 = vst [vmem:[%s515 + $0xc] sm:$0x3] %v528
                  %v530 = vld [vmem:[%s514 + $0x1c] sm:$0x3]
                  %531 = vst [vmem:[%s515 + $0xe] sm:$0x3] %v530
                  %v532 = vld [vmem:[%s514 + $0x20] sm:$0x3]
                  %533 = vst [vmem:[%s515 + $0x10] sm:$0x3] %v532
                $region136: #{shufflev2_downsample.3} parent=123 // loop_footer
                  %s513 = sadd.s32 1, %s509
                $region137: #{shufflev2_downsample.3} parent=123 // loop_footer_branch
                  %508 = sbr.rel target = $region133
                $region138: #{shufflev2_downsample.3} parent=123 // loop_exit
                  _
              $region124: #{shufflev2_downsample.3} parent=108 // pred_fallthru
                _
            $region109: #{shufflev2_downsample.3} parent=104 // pred_fallthru
              _
            // Predicated region
            $region110: #{shufflev2_downsample.3} parent=104 // pred_check
              _
            $region111: #{shufflev2_downsample.3} parent=104 // pred_check_branch
              %469 = sbr.rel (0) target = $region113
            $region112: #{shufflev2_downsample.3} parent=104 // pred_region
              loop: start=0, step=1, limit=1
              $region114: #{shufflev2_downsample.3} parent=112 // loop_pre_header
                _
              $region115: #{shufflev2_downsample.3} parent=112 // loop_header
                %s472 = sphi 0, %s476
                %p473 = scmp.ge.s32.totalorder %s472, 1
                %s477 = sphi %s463, %s463
                %s478 = sphi %s460, %s460
              $region116: #{shufflev2_downsample.3} parent=112 // loop_header_branch
                %475 = sbr.rel (%p473) target = $region120
              $region117: #{shufflev2_downsample.3} parent=112 // loop_body
                %v479 = vld [vmem:[%s477] sm:$0x3]
                %480 = vst [vmem:[%s478] sm:$0x3] %v479
                %v481 = vld [vmem:[%s477 + $0x4] sm:$0x3]
                %482 = vst [vmem:[%s478 + $0x2] sm:$0x3] %v481
                %v483 = vld [vmem:[%s477 + $0x8] sm:$0x3]
                %484 = vst [vmem:[%s478 + $0x4] sm:$0x3] %v483
                %v485 = vld [vmem:[%s477 + $0xc] sm:$0x3]
                %486 = vst [vmem:[%s478 + $0x6] sm:$0x3] %v485
                %v487 = vld [vmem:[%s477 + $0x10] sm:$0x3]
                %488 = vst [vmem:[%s478 + $0x8] sm:$0x3] %v487
                %v489 = vld [vmem:[%s477 + $0x14] sm:$0x3]
                %490 = vst [vmem:[%s478 + $0xa] sm:$0x3] %v489
                %v491 = vld [vmem:[%s477 + $0x18] sm:$0x3]
                %492 = vst [vmem:[%s478 + $0xc] sm:$0x3] %v491
                %v493 = vld [vmem:[%s477 + $0x1c] sm:$0x3]
                %494 = vst [vmem:[%s478 + $0xe] sm:$0x3] %v493
                %v495 = vld [vmem:[%s477 + $0x20] sm:$0x3]
                %496 = vst [vmem:[%s478 + $0x10] sm:$0x3] %v495
              $region118: #{shufflev2_downsample.3} parent=112 // loop_footer
                %s476 = sadd.s32 1, %s472
              $region119: #{shufflev2_downsample.3} parent=112 // loop_footer_branch
                %471 = sbr.rel target = $region115
              $region120: #{shufflev2_downsample.3} parent=112 // loop_exit
                _
            $region113: #{shufflev2_downsample.3} parent=104 // pred_fallthru
              _
          $region105: #{shufflev2_downsample.3} parent=100 // pred_fallthru
            _
          %534 = vnop
        $region101: #{shufflev2_downsample.3} parent=55 // pred_fallthru
          _
      $region56: #{shufflev2_downsample.3} parent=5 // pred_fallthru
        _
      %p535 = scmp.le.s32.totalorder 1, %s18
      %p536 = scmp.lt.s32.totalorder %s18, 3
      %p537 = pnand %p535, %p536
      %p538 = pneg %p537
      // Predicated region
      $region139: #{shufflev2_downsample.3} parent=5 // pred_check
        _
      $region140: #{shufflev2_downsample.3} parent=5 // pred_check_branch
        %540 = sbr.rel (%p537) target = $region142
      $region141: #{shufflev2_downsample.3} parent=5 // pred_region
        %s541 = ssub.s32 %s18, 1
        %s542 = sand.u32 %s45, 1
        %s543 = sand.u32 %s45, 1
        %s544 = smul.addr %s543, 36
        %s545 = scalar_lea.vmem [#allocation2], %s544
        // Predicated region
        $region143: #{shufflev2_downsample.3} parent=141 // pred_check
          %p546 = pneg %p58
        $region144: #{shufflev2_downsample.3} parent=141 // pred_check_branch
          %548 = sbr.rel (%p546) target = $region146
        $region145: #{shufflev2_downsample.3} parent=141 // pred_region
          _
        $region146: #{shufflev2_downsample.3} parent=141 // pred_fallthru
          _
        %s549 = sand.u32 %s73, 1
        %s550 = sand.u32 %s73, 1
        %s551 = smul.addr %s550, 18
        %s552 = scalar_lea.vmem [#allocation3], %s551
        // Predicated region
        $region147: #{shufflev2_downsample.3} parent=141 // pred_check
          %p553 = pneg %p86
        $region148: #{shufflev2_downsample.3} parent=141 // pred_check_branch
          %555 = sbr.rel (%p553) target = $region150
        $region149: #{shufflev2_downsample.3} parent=141 // pred_region
          _
        $region150: #{shufflev2_downsample.3} parent=141 // pred_fallthru
          _
        %s556 = sand.u32 %s45, 1
        %s557 = sand.u32 %s45, 1
        %s558 = smul.addr %s557, 36
        %s559 = scalar_lea.vmem [#allocation2], %s558
        %p560 = pneg %p58
        %p561 = pneg %p55
        %s562 = sand.u32 %s73, 1
        %s563 = sand.u32 %s73, 1
        %s564 = smul.addr %s563, 18
        %s565 = scalar_lea.vmem [#allocation3], %s564
        %p566 = pneg %p86
        %p567 = pneg %p83
        %p568 = pneg %p107
        %p569 = pneg %p104
        %p570 = pneg %p128
        %p571 = pneg %p125
        %p572 = pneg %p149
        %p573 = pneg %p146
        %p574 = pneg %p170
        %p575 = pneg %p167
        %p576 = pneg %p191
        %p577 = pneg %p188
        %p578 = pneg %p212
        %p579 = pneg %p209
        %p580 = pneg %p233
        %p581 = pneg %p230
        %p582 = pneg %p254
        %p583 = pneg %p251
        %p584 = pneg %p275
        %p585 = pneg %p272
        %p586 = pneg %p296
        %p587 = pneg %p293
        %p588 = pneg %p324
        %p589 = pneg %p321
        %p590 = scmp.lt.s32.totalorder %s27, 1
        %s591 = scalar_select %p590, %s27, 1
        %p592 = scmp.lt.s32.totalorder %s28, 0
        %s593 = scalar_select %p592, %s28, 0
        %s594 = sadd.s32 %s593, %s591
        %s595 = smul.addr %s594, 8
        %s596 = scalar_lea.vmem %s12, %s595
        %p597 = scmp.lt.s32.totalorder %s27, 1
        %s598 = scalar_select %p597, %s27, 1
        %p599 = scmp.lt.s32.totalorder %s28, 0
        %s600 = scalar_select %p599, %s28, 0
        %s601 = sadd.s32 %s600, %s598
        %s602 = smul.addr %s601, 8
        %s603 = scalar_lea.vmem %s12, %s602
        %v604 = vld [vmem:[%s2] sm:$0xf]
        %v605 = vld [vmem:[%s2 + $0x4] sm:$0xf]
        %v606 = vld [vmem:[%s2 + $0x8] sm:$0xf]
        %v607 = vld [vmem:[%s2 + $0xc] sm:$0xf]
        %v608 = vld [vmem:[%s2 + $0x10] sm:$0xf]
        %v609 = vld [vmem:[%s2 + $0x14] sm:$0xf]
        %v610 = vld [vmem:[%s2 + $0x18] sm:$0xf]
        %v611 = vld [vmem:[%s2 + $0x1c] sm:$0xf]
        %v612 = vld [vmem:[%s2 + $0x20] sm:$0xf]
        %v613 = vld [vmem:[%s545] sm:$0xf]
        %615 = vset.pattern.permute.xlu0 0
        %616 = vperm.xlu0 %615, %v604
        %v617 = vpop.permute.xlu0 %616
        %v619 = vmul.f32 %v613, %v617
        %s620 = scalar_lea.vmem %s545, 4 [#allocation2]
        %v621 = vld [vmem:[%s620] sm:$0xf]
        %623 = vset.pattern.permute.xlu0 0
        %624 = vperm.xlu0 %623, %v605
        %v625 = vpop.permute.xlu0 %624
        %v627 = vmul.f32 %v621, %v625
        %v628 = vadd.f32 %v619, %v627
        %s629 = scalar_lea.vmem %s545, 8 [#allocation2]
        %v630 = vld [vmem:[%s629] sm:$0xf]
        %632 = vset.pattern.permute.xlu0 0
        %633 = vperm.xlu0 %632, %v606
        %v634 = vpop.permute.xlu0 %633
        %v636 = vmul.f32 %v630, %v634
        %v637 = vadd.f32 %v628, %v636
        %s638 = scalar_lea.vmem %s545, 12 [#allocation2]
        %v639 = vld [vmem:[%s638] sm:$0xf]
        %641 = vset.pattern.permute.xlu0 0
        %642 = vperm.xlu0 %641, %v607
        %v643 = vpop.permute.xlu0 %642
        %v645 = vmul.f32 %v639, %v643
        %v646 = vadd.f32 %v637, %v645
        %s647 = scalar_lea.vmem %s545, 16 [#allocation2]
        %v648 = vld [vmem:[%s647] sm:$0xf]
        %650 = vset.pattern.permute.xlu0 0
        %651 = vperm.xlu0 %650, %v608
        %v652 = vpop.permute.xlu0 %651
        %v654 = vmul.f32 %v648, %v652
        %v655 = vadd.f32 %v646, %v654
        %s656 = scalar_lea.vmem %s545, 20 [#allocation2]
        %v657 = vld [vmem:[%s656] sm:$0xf]
        %659 = vset.pattern.permute.xlu0 0
        %660 = vperm.xlu0 %659, %v609
        %v661 = vpop.permute.xlu0 %660
        %v663 = vmul.f32 %v657, %v661
        %v664 = vadd.f32 %v655, %v663
        %s665 = scalar_lea.vmem %s545, 24 [#allocation2]
        %v666 = vld [vmem:[%s665] sm:$0xf]
        %668 = vset.pattern.permute.xlu0 0
        %669 = vperm.xlu0 %668, %v610
        %v670 = vpop.permute.xlu0 %669
        %v672 = vmul.f32 %v666, %v670
        %v673 = vadd.f32 %v664, %v672
        %s674 = scalar_lea.vmem %s545, 28 [#allocation2]
        %v675 = vld [vmem:[%s674] sm:$0xf]
        %677 = vset.pattern.permute.xlu0 0
        %678 = vperm.xlu0 %677, %v611
        %v679 = vpop.permute.xlu0 %678
        %v681 = vmul.f32 %v675, %v679
        %v682 = vadd.f32 %v673, %v681
        %s683 = scalar_lea.vmem %s545, 32 [#allocation2]
        %v684 = vld [vmem:[%s683] sm:$0xf]
        %686 = vset.pattern.permute.xlu0 0
        %687 = vperm.xlu0 %686, %v612
        %v688 = vpop.permute.xlu0 %687
        %v690 = vmul.f32 %v684, %v688
        %v691 = vadd.f32 %v682, %v690
        %v692 = vld [vmem:[%s3] sm:$0xf]
        %694 = vset.pattern.permute.xlu0 0
        %695 = vperm.xlu0 %694, %v692
        %v696 = vpop.permute.xlu0 %695
        %v698 = vmul.f32 %v691, %v696
        %v699 = vld [vmem:[%s4] sm:$0xf]
        %701 = vset.pattern.permute.xlu0 0
        %702 = vperm.xlu0 %701, %v699
        %v703 = vpop.permute.xlu0 %702
        %v705 = vadd.f32 %v698, %v703
        %v706 = vld [vmem:[%s5] sm:$0x3]
        %v707 = vld [vmem:[%s5 + $0x2] sm:$0x3]
        %v708 = vld [vmem:[%s5 + $0x4] sm:$0x3]
        %v709 = vld [vmem:[%s5 + $0x6] sm:$0x3]
        %v710 = vld [vmem:[%s5 + $0x8] sm:$0x3]
        %v711 = vld [vmem:[%s5 + $0xa] sm:$0x3]
        %v712 = vld [vmem:[%s5 + $0xc] sm:$0x3]
        %v713 = vld [vmem:[%s5 + $0xe] sm:$0x3]
        %v714 = vld [vmem:[%s5 + $0x10] sm:$0x3]
        %v715 = vld [vmem:[%s552] sm:$0x3]
        %717 = vset.pattern.permute.xlu0 0
        %718 = vperm.xlu0 %717, %v706
        %v719 = vpop.permute.xlu0 %718
        %v721 = vmul.f32 %v715, %v719
        %s722 = scalar_lea.vmem %s552, 2 [#allocation3]
        %v723 = vld [vmem:[%s722] sm:$0x3]
        %725 = vset.pattern.permute.xlu0 0
        %726 = vperm.xlu0 %725, %v707
        %v727 = vpop.permute.xlu0 %726
        %v729 = vmul.f32 %v723, %v727
        %v730 = vadd.f32 %v721, %v729
        %s731 = scalar_lea.vmem %s552, 4 [#allocation3]
        %v732 = vld [vmem:[%s731] sm:$0x3]
        %734 = vset.pattern.permute.xlu0 0
        %735 = vperm.xlu0 %734, %v708
        %v736 = vpop.permute.xlu0 %735
        %v738 = vmul.f32 %v732, %v736
        %v739 = vadd.f32 %v730, %v738
        %s740 = scalar_lea.vmem %s552, 6 [#allocation3]
        %v741 = vld [vmem:[%s740] sm:$0x3]
        %743 = vset.pattern.permute.xlu0 0
        %744 = vperm.xlu0 %743, %v709
        %v745 = vpop.permute.xlu0 %744
        %v747 = vmul.f32 %v741, %v745
        %v748 = vadd.f32 %v739, %v747
        %s749 = scalar_lea.vmem %s552, 8 [#allocation3]
        %v750 = vld [vmem:[%s749] sm:$0x3]
        %752 = vset.pattern.permute.xlu0 0
        %753 = vperm.xlu0 %752, %v710
        %v754 = vpop.permute.xlu0 %753
        %v756 = vmul.f32 %v750, %v754
        %v757 = vadd.f32 %v748, %v756
        %s758 = scalar_lea.vmem %s552, 10 [#allocation3]
        %v759 = vld [vmem:[%s758] sm:$0x3]
        %761 = vset.pattern.permute.xlu0 0
        %762 = vperm.xlu0 %761, %v711
        %v763 = vpop.permute.xlu0 %762
        %v765 = vmul.f32 %v759, %v763
        %v766 = vadd.f32 %v757, %v765
        %s767 = scalar_lea.vmem %s552, 12 [#allocation3]
        %v768 = vld [vmem:[%s767] sm:$0x3]
        %770 = vset.pattern.permute.xlu0 0
        %771 = vperm.xlu0 %770, %v712
        %v772 = vpop.permute.xlu0 %771
        %v774 = vmul.f32 %v768, %v772
        %v775 = vadd.f32 %v766, %v774
        %s776 = scalar_lea.vmem %s552, 14 [#allocation3]
        %v777 = vld [vmem:[%s776] sm:$0x3]
        %779 = vset.pattern.permute.xlu0 0
        %780 = vperm.xlu0 %779, %v713
        %v781 = vpop.permute.xlu0 %780
        %v783 = vmul.f32 %v777, %v781
        %v784 = vadd.f32 %v775, %v783
        %s785 = scalar_lea.vmem %s552, 16 [#allocation3]
        %v786 = vld [vmem:[%s785] sm:$0x3]
        %788 = vset.pattern.permute.xlu0 0
        %789 = vperm.xlu0 %788, %v714
        %v790 = vpop.permute.xlu0 %789
        %v792 = vmul.f32 %v786, %v790
        %v793 = vadd.f32 %v784, %v792
        %v794 = vld [vmem:[%s6] sm:$0x3]
        %796 = vset.pattern.permute.xlu0 0
        %797 = vperm.xlu0 %796, %v794
        %v798 = vpop.permute.xlu0 %797
        %v800 = vmul.f32 %v793, %v798
        %v801 = vld [vmem:[%s7] sm:$0x3]
        %803 = vset.pattern.permute.xlu0 0
        %804 = vperm.xlu0 %803, %v801
        %v805 = vpop.permute.xlu0 %804
        %v807 = vadd.f32 %v800, %v805
        %v808 = vld [vmem:[%s8] sm:$0xff]
        %v809 = vld [vmem:[%s9] sm:$0xff]
        %vm810 = vcmask 15360
        %v812 = vsel %vm810, %v809, 0
        %vm814 = vcmask 1041408
        %v816 = vsel %vm814, %v807, 0
        %818 = vmatprep.subr.mxu0 0.0
        %819 = vmatpush1.msra.mxu0 %v816
        %820 = vmatprep.subr.mxu0 0.0
        %821 = vmatpush1.msra.mxu0 0.0
        %822 = vmatprep.subr.mxu0 0.0
        %823 = vmatpush1.msra.mxu0 0.0
        %824 = vmatprep.subr.mxu0 0.0
        %825 = vmatpush1.msra.mxu0 0.0
        %826 = vmatprep.subr.mxu0 0.0
        %827 = vmatpush1.msra.mxu0 0.0
        %828 = vmatprep.subr.mxu0 0.0
        %829 = vmatpush1.msra.mxu0 0.0
        %830 = vmatprep.subr.mxu0 0.0
        %831 = vmatpush1.msra.mxu0 0.0
        %832 = vmatprep.subr.mxu0 0.0
        %833 = vmatpush1.msra.mxu0 0.0
        %834 = vmatprep.subr.mxu0 0.0
        %835 = vmatpush1.msra.mxu0 0.0
        %836 = vmatprep.subr.mxu0 0.0
        %837 = vmatpush1.msra.mxu0 0.0
        %838 = vmatprep.subr.mxu0 0.0
        %839 = vmatpush1.msra.mxu0 0.0
        %840 = vmatprep.subr.mxu0 0.0
        %841 = vmatpush1.msra.mxu0 0.0
        %842 = vmatprep.subr.mxu0 0.0
        %843 = vmatpush1.msra.mxu0 0.0
        %844 = vmatprep.subr.mxu0 0.0
        %845 = vmatpush1.msra.mxu0 0.0
        %846 = vmatprep.subr.mxu0 0.0
        %847 = vmatpush1.msra.mxu0 0.0
        %848 = vmatprep.subr.mxu0 0.0
        %849 = vmatpush1.msra.mxu0 0.0
        %850 = vmatprep.subr.mxu0 0.0
        %851 = vmatpush1.msra.mxu0 0.0
        %852 = vmatprep.subr.mxu0 0.0
        %853 = vmatpush1.msra.mxu0 0.0
        %854 = vmatprep.subr.mxu0 0.0
        %855 = vmatpush1.msra.mxu0 0.0
        %856 = vmatprep.subr.mxu0 0.0
        %857 = vmatpush1.msra.mxu0 0.0
        %858 = vmatprep.subr.mxu0 0.0
        %859 = vmatpush1.msra.mxu0 0.0
        %860 = vmatprep.subr.mxu0 0.0
        %861 = vmatpush1.msra.mxu0 0.0
        %862 = vmatprep.subr.mxu0 0.0
        %863 = vmatpush1.msra.mxu0 0.0
        %864 = vmatprep.subr.mxu0 0.0
        %865 = vmatpush1.msra.mxu0 0.0
        %866 = vmatprep.subr.mxu0 0.0
        %867 = vmatpush1.msra.mxu0 0.0
        %868 = vmatprep.subr.mxu0 0.0
        %869 = vmatpush1.msra.mxu0 0.0
        %870 = vmatprep.subr.mxu0 0.0
        %871 = vmatpush1.msra.mxu0 0.0
        %872 = vmatprep.subr.mxu0 0.0
        %873 = vmatpush1.msra.mxu0 0.0
        %874 = vmatprep.subr.mxu0 0.0
        %875 = vmatpush1.msra.mxu0 0.0
        %876 = vmatprep.subr.mxu0 0.0
        %877 = vmatpush1.msra.mxu0 0.0
        %878 = vmatprep.subr.mxu0 0.0
        %879 = vmatpush1.msra.mxu0 0.0
        %880 = vmatprep.subr.mxu0 0.0
        %881 = vmatpush1.msra.mxu0 0.0
        %882 = vmatprep.mubr.f32.mxu0 0.0
        %883 = vmatmul.mubr.f32.gmra.mrb[0].mxu0 %v812
        %v884 = vpop.f32.mrb[0].mxu0
        %v885 = vadd.f32 0.0, %v884
        %v886 = vpop.f32.mrb[0].mxu0
        %887 = vdwg.mxu0
        %vm888 = vcmask 31744
        %v890 = vsel %vm888, %v808, 0
        %vm892 = vcmask 1043456
        %v894 = vsel %vm892, %v705, 0
        %896 = vmatprep.subr.mxu0 0.0
        %897 = vmatpush1.msra.mxu0 %v894
        %898 = vmatprep.subr.mxu0 0.0
        %899 = vmatpush1.msra.mxu0 0.0
        %900 = vmatprep.subr.mxu0 0.0
        %901 = vmatpush1.msra.mxu0 0.0
        %902 = vmatprep.subr.mxu0 0.0
        %903 = vmatpush1.msra.mxu0 0.0
        %904 = vmatprep.subr.mxu0 0.0
        %905 = vmatpush1.msra.mxu0 0.0
        %906 = vmatprep.subr.mxu0 0.0
        %907 = vmatpush1.msra.mxu0 0.0
        %908 = vmatprep.subr.mxu0 0.0
        %909 = vmatpush1.msra.mxu0 0.0
        %910 = vmatprep.subr.mxu0 0.0
        %911 = vmatpush1.msra.mxu0 0.0
        %912 = vmatprep.subr.mxu0 0.0
        %913 = vmatpush1.msra.mxu0 0.0
        %914 = vmatprep.subr.mxu0 0.0
        %915 = vmatpush1.msra.mxu0 0.0
        %916 = vmatprep.subr.mxu0 0.0
        %917 = vmatpush1.msra.mxu0 0.0
        %918 = vmatprep.subr.mxu0 0.0
        %919 = vmatpush1.msra.mxu0 0.0
        %920 = vmatprep.subr.mxu0 0.0
        %921 = vmatpush1.msra.mxu0 0.0
        %922 = vmatprep.subr.mxu0 0.0
        %923 = vmatpush1.msra.mxu0 0.0
        %924 = vmatprep.subr.mxu0 0.0
        %925 = vmatpush1.msra.mxu0 0.0
        %926 = vmatprep.subr.mxu0 0.0
        %927 = vmatpush1.msra.mxu0 0.0
        %928 = vmatprep.subr.mxu0 0.0
        %929 = vmatpush1.msra.mxu0 0.0
        %930 = vmatprep.subr.mxu0 0.0
        %931 = vmatpush1.msra.mxu0 0.0
        %932 = vmatprep.subr.mxu0 0.0
        %933 = vmatpush1.msra.mxu0 0.0
        %934 = vmatprep.subr.mxu0 0.0
        %935 = vmatpush1.msra.mxu0 0.0
        %936 = vmatprep.subr.mxu0 0.0
        %937 = vmatpush1.msra.mxu0 0.0
        %938 = vmatprep.subr.mxu0 0.0
        %939 = vmatpush1.msra.mxu0 0.0
        %940 = vmatprep.subr.mxu0 0.0
        %941 = vmatpush1.msra.mxu0 0.0
        %942 = vmatprep.subr.mxu0 0.0
        %943 = vmatpush1.msra.mxu0 0.0
        %944 = vmatprep.subr.mxu0 0.0
        %945 = vmatpush1.msra.mxu0 0.0
        %946 = vmatprep.subr.mxu0 0.0
        %947 = vmatpush1.msra.mxu0 0.0
        %948 = vmatprep.subr.mxu0 0.0
        %949 = vmatpush1.msra.mxu0 0.0
        %950 = vmatprep.subr.mxu0 0.0
        %951 = vmatpush1.msra.mxu0 0.0
        %952 = vmatprep.subr.mxu0 0.0
        %953 = vmatpush1.msra.mxu0 0.0
        %954 = vmatprep.subr.mxu0 0.0
        %955 = vmatpush1.msra.mxu0 0.0
        %956 = vmatprep.subr.mxu0 0.0
        %957 = vmatpush1.msra.mxu0 0.0
        %958 = vmatprep.subr.mxu0 0.0
        %959 = vmatpush1.msra.mxu0 0.0
        %960 = vmatprep.mubr.f32.mxu0 0.0
        %961 = vmatmul.mubr.f32.gmra.mrb[0].mxu0 %v890
        %v962 = vpop.f32.mrb[0].mxu0
        %v963 = vadd.f32 %v885, %v962
        %v964 = vpop.f32.mrb[0].mxu0
        %965 = vdwg.mxu0
        %v966 = vld [vmem:[%s10] sm:$0xff]
        %968 = vset.pattern.permute.xlu0 0
        %969 = vperm.xlu0 %968, %v966
        %v970 = vpop.permute.xlu0 %969
        %v972 = vmul.f32 %v963, %v970
        %v973 = vld [vmem:[%s11] sm:$0xff]
        %975 = vset.pattern.permute.xlu0 0
        %976 = vperm.xlu0 %975, %v973
        %v977 = vpop.permute.xlu0 %976
        %v979 = vadd.f32 %v972, %v977
        %v980 = vadd.f32 %v979, 3.0
        %v981 = vmul.f32 %v980, 0.16666667
        %v982 = vmax.f32 %v981, 0.0
        %v983 = vmin.f32 %v982, 1.0
        %v984 = vmul.f32 %v979, %v983
        %985 = vst [vmem:[%s603] sm:$0xff] %v984
        %p986 = scmp.lt.s32.totalorder %s27, 1
        %s987 = scalar_select %p986, %s27, 1
        %p988 = scmp.lt.s32.totalorder %s28, 0
        %s989 = scalar_select %p988, %s28, 0
        %s990 = sadd.s32 %s989, %s987
        %s991 = smul.addr %s990, 8
        %s992 = scalar_lea.vmem %s12, %s991
        // Predicated region
        $region151: #{shufflev2_downsample.3} parent=141 // pred_check
          %p993 = pneg %p321
        $region152: #{shufflev2_downsample.3} parent=141 // pred_check_branch
          %995 = sbr.rel (%p993) target = $region154
        $region153: #{shufflev2_downsample.3} parent=141 // pred_region
          _
        $region154: #{shufflev2_downsample.3} parent=141 // pred_fallthru
          _
      $region142: #{shufflev2_downsample.3} parent=5 // pred_fallthru
        _
      %p996 = scmp.le.s32.totalorder 2, %s18
      // Predicated region
      $region155: #{shufflev2_downsample.3} parent=5 // pred_check
        %p997 = pneg %p996
      $region156: #{shufflev2_downsample.3} parent=5 // pred_check_branch
        %999 = sbr.rel (%p997) target = $region158
      $region157: #{shufflev2_downsample.3} parent=5 // pred_region
        %s1000 = ssub.s32 %s18, 2
        // Predicated region
        $region159: #{shufflev2_downsample.3} parent=157 // pred_check
          %p1001 = pneg %p327
        $region160: #{shufflev2_downsample.3} parent=157 // pred_check_branch
          %1003 = sbr.rel (%p1001) target = $region162
        $region161: #{shufflev2_downsample.3} parent=157 // pred_region
          %p1004 = scmp.lt.s32.totalorder %s29, 1
          %s1005 = scalar_select %p1004, %s29, 1
          %p1006 = scmp.lt.s32.totalorder %s30, 0
          %s1007 = scalar_select %p1006, %s30, 0
          %s1008 = sadd.s32 %s1007, %s1005
          %s1009 = smul.addr %s1008, 8
          %s1010 = scalar_lea.vmem %s12, %s1009
        $region162: #{shufflev2_downsample.3} parent=157 // pred_fallthru
          _
      $region158: #{shufflev2_downsample.3} parent=5 // pred_fallthru
        _
    $region6: #{shufflev2_downsample.3} parent=1 // loop_footer
      %s22 = sadd.s32 1, %s18
    $region7: #{shufflev2_downsample.3} parent=1 // loop_footer_branch
      %17 = sbr.rel target = $region3
    $region8: #{shufflev2_downsample.3} parent=1 // loop_exit
      _

</llo_original>
